<compile_context>
chip_gen: v5e
topology: v5e:2x2
jax: 0.10.0
libtpu: 0.0.40
codegen_flags: <defaults>
</compile_context>

<pallas_src>
import jax
import jax.numpy as jnp
from jax import lax
from jax.experimental import pallas as pl
from jax.experimental.pallas import tpu as pltpu

_LANE = 128      # vreg lane width
_SUBLANE = 8     # vreg sublane count (f32)


def _round_up(x, m):
    return (x + m - 1) // m * m


def _sigmoid(x):
    # EUP-only sigmoid (tanh) + cheap VALU mul/add; avoids a serial divide.
    return 0.5 * (jnp.tanh(0.5 * x) + 1.0)


def name_gender_kernel(ids_ref, wxg_ref, bias_ref, whh_ref, fcw_ref, fcb_ref,
                       out_ref):
    ids = ids_ref[...]          # (T*Bp, 1) int32, time-major flattened
    wxg = wxg_ref[...]          # (Vp, 4*Hp) f32  = emb @ w_ih.T (gate-padded)
    bias = bias_ref[...]        # (1, 4*Hp)  f32  = b_ih + b_hh (gate-padded)
    whh = whh_ref[...]          # (Hp, 4*Hp) f32  = w_hh.T (gate-padded)
    fcw = fcw_ref[...]          # (Hp, LANE) f32  (real fc weight in col 0)
    fcb = fcb_ref[...]          # (1, LANE)  f32  (real fc bias in col 0)

    TB, _ = ids.shape
    Vp = wxg.shape[0]
    Hp = whh.shape[0]
    Bp = out_ref.shape[0]
    T = TB // Bp

    # Embedding gather + input projection for ALL timesteps: a single
    # (T*Bp, Vp) @ (Vp, 4*Hp) matmul, hoisted out of the serial recurrence.
    vocab_iota = lax.broadcasted_iota(jnp.int32, (TB, Vp), 1)
    onehot = (vocab_iota == ids).astype(jnp.float32)                    # (TB, Vp)
    x_gates = jnp.dot(onehot, wxg,
                      preferred_element_type=jnp.float32) + bias        # (TB, 4Hp)

    h = jnp.zeros((Bp, Hp), jnp.float32)
    c = jnp.zeros((Bp, Hp), jnp.float32)

    # Serial LSTM recurrence: only h @ W_hh^T remains per step (T is static).
    for t in range(T):
        gates = x_gates[t * Bp:(t + 1) * Bp, :] + jnp.dot(
            h, whh, preferred_element_type=jnp.float32)                 # (Bp, 4Hp)
        # PyTorch gate order [i, f, g, o]; slices are 128-lane aligned.
        i_g = _sigmoid(gates[:, 0 * Hp:1 * Hp])
        f_g = _sigmoid(gates[:, 1 * Hp:2 * Hp])
        g_g = jnp.tanh(gates[:, 2 * Hp:3 * Hp])
        o_g = _sigmoid(gates[:, 3 * Hp:4 * Hp])
        c = f_g * c + i_g * g_g
        h = o_g * jnp.tanh(c)

    # x[:, -1, :] is simply the final hidden state h.
    logits = jnp.dot(h, fcw, preferred_element_type=jnp.float32) + fcb  # (Bp, LANE)
    out_ref[...] = _sigmoid(logits)


def name_gender_forward(ids, emb, w_ih, w_hh, b_ih, b_hh, fc_w, fc_b):
    ids = ids.astype(jnp.int32)
    B, T = ids.shape
    V, E = emb.shape
    H = w_hh.shape[1]

    Bp = _round_up(max(B, _SUBLANE), _SUBLANE)
    Hp = _round_up(max(H, _LANE), _LANE)
    Vp = _round_up(max(V, _LANE), _LANE)

    f32 = jnp.float32
    emb = emb.astype(f32)
    w_ih = w_ih.astype(f32)
    w_hh = w_hh.astype(f32)
    b_ih = b_ih.astype(f32)
    b_hh = b_hh.astype(f32)
    fc_w = fc_w.astype(f32)
    fc_b = fc_b.astype(f32)
    hi = lax.Precision.HIGHEST

    # Fold embedding into the input projection; pad per-gate to Hp lanes so
    # each gate slice starts at a 128-lane boundary, and pad V to Vp lanes so
    # the one-hot LHS is lane-dense.
    wxg = jnp.dot(emb, w_ih.T, precision=hi)                     # (V, 4H)
    wxg = wxg.reshape(V, 4, H)
    wxg = jnp.pad(wxg, ((0, Vp - V), (0, 0), (0, Hp - H))).reshape(Vp, 4 * Hp)

    bias = (b_ih + b_hh).reshape(4, H)
    bias = jnp.pad(bias, ((0, 0), (0, Hp - H))).reshape(1, 4 * Hp)

    whh = w_hh.T.reshape(H, 4, H)                                # (H, 4, H)
    whh = jnp.pad(whh, ((0, Hp - H), (0, 0), (0, Hp - H))).reshape(Hp, 4 * Hp)

    fcw = jnp.pad(fc_w.T, ((0, Hp - H), (0, _LANE - 1)))         # (Hp, LANE)
    fcb = jnp.pad(fc_b.reshape(1, 1), ((0, 0), (0, _LANE - 1)))  # (1, LANE)

    # Time-major flattened ids; padded batch rows use padding index 0.
    ids_p = jnp.pad(ids, ((0, Bp - B), (0, 0)))                  # (Bp, T)
    ids_tm = ids_p.T.reshape(T * Bp, 1)                          # (T*Bp, 1)

    vmem = pl.BlockSpec(memory_space=pltpu.MemorySpace.VMEM)
    out = pl.pallas_call(
        name_gender_kernel,
        out_shape=jax.ShapeDtypeStruct((Bp, _LANE), jnp.float32),
        in_specs=[vmem] * 6,
        out_specs=vmem,
    )(ids_tm, wxg, bias, whh, fcw, fcb)
    return out[:B, :1]


def reference_forward(ids, emb, w_ih, w_hh, b_ih, b_hh, fc_w, fc_b):
    """Plain-JAX reference for correctness checking."""
    H = w_hh.shape[1]
    hi = lax.Precision.HIGHEST
    x = emb[ids]                                   # (B, T, E)
    B, T, _ = x.shape
    h = jnp.zeros((B, H), jnp.float32)
    c = jnp.zeros((B, H), jnp.float32)
    for t in range(T):
        gates = (jnp.dot(x[:, t], w_ih.T, precision=hi)
                 + jnp.dot(h, w_hh.T, precision=hi) + b_ih + b_hh)
        i_g = jax.nn.sigmoid(gates[:, 0 * H:1 * H])
        f_g = jax.nn.sigmoid(gates[:, 1 * H:2 * H])
        g_g = jnp.tanh(gates[:, 2 * H:3 * H])
        o_g = jax.nn.sigmoid(gates[:, 3 * H:4 * H])
        c = f_g * c + i_g * g_g
        h = o_g * jnp.tanh(c)
    return jax.nn.sigmoid(jnp.dot(h, fc_w.T, precision=hi) + fc_b)


if __name__ == "__main__":
    # Small, deterministic configuration consistent with the module.
    vocab_size = 27          # 26 letters + padding index 0
    embed_dim = 10
    hidden_dim = 20
    batch = 2
    seq = 8

    key = jax.random.PRNGKey(0)
    k_emb, k_wih, k_whh, k_bih, k_bhh, k_fcw, k_fcb, k_ids = jax.random.split(key, 8)

    # Embedding ~ N(0,1), padding row zeroed (padding_idx=0).
    emb = jax.random.normal(k_emb, (vocab_size, embed_dim), jnp.float32)
    emb = emb.at[0].set(0.0)

    # LSTM / Linear params: uniform(-1/sqrt(H), 1/sqrt(H)) like PyTorch defaults.
    bound = 1.0 / jnp.sqrt(jnp.float32(hidden_dim))
    w_ih = jax.random.uniform(k_wih, (4 * hidden_dim, embed_dim), jnp.float32, -bound, bound)
    w_hh = jax.random.uniform(k_whh, (4 * hidden_dim, hidden_dim), jnp.float32, -bound, bound)
    b_ih = jax.random.uniform(k_bih, (4 * hidden_dim,), jnp.float32, -bound, bound)
    b_hh = jax.random.uniform(k_bhh, (4 * hidden_dim,), jnp.float32, -bound, bound)
    fc_w = jax.random.uniform(k_fcw, (1, hidden_dim), jnp.float32, -bound, bound)
    fc_b = jax.random.uniform(k_fcb, (1,), jnp.float32, -bound, bound)

    # Character-id input, 0 is padding.
    ids = jax.random.randint(k_ids, (batch, seq), 0, vocab_size, jnp.int32)

    out = name_gender_forward(ids, emb, w_ih, w_hh, b_ih, b_hh, fc_w, fc_b)
    out = jax.block_until_ready(out)

    ref = reference_forward(ids, emb, w_ih, w_hh, b_ih, b_hh, fc_w, fc_b)
    assert out.shape == (batch, 1)
    assert jnp.allclose(out, ref, atol=2e-5, rtol=1e-4), (out, ref)

    print("KERNEL_OK")
</pallas_src>

<mosaic_0001>
module attributes {stable_mosaic.version = 11 : i64} {
  func.func @name_gender_kernel(%arg0: memref<64x1xi32, #tpu.memory_space<vmem>>, %arg1: memref<128x512xf32, #tpu.memory_space<vmem>>, %arg2: memref<1x512xf32, #tpu.memory_space<vmem>>, %arg3: memref<128x512xf32, #tpu.memory_space<vmem>>, %arg4: memref<128x128xf32, #tpu.memory_space<vmem>>, %arg5: memref<1x128xf32, #tpu.memory_space<vmem>>, %arg6: memref<8x128xf32, #tpu.memory_space<vmem>>) attributes {dimension_semantics = [], scalar_prefetch = 0 : i64, scratch_operands = 0 : i64, tpu.core_type = #tpu.core_type<tc>} {
    %c0 = arith.constant 0 : index
    %c0_0 = arith.constant 0 : index
    %0 = vector.load %arg0[%c0, %c0_0] : memref<64x1xi32, #tpu.memory_space<vmem>>, vector<64x1xi32>
    %c0_1 = arith.constant 0 : index
    %c0_2 = arith.constant 0 : index
    %1 = vector.load %arg1[%c0_1, %c0_2] : memref<128x512xf32, #tpu.memory_space<vmem>>, vector<128x512xf32>
    %c0_3 = arith.constant 0 : index
    %c0_4 = arith.constant 0 : index
    %2 = vector.load %arg2[%c0_3, %c0_4] : memref<1x512xf32, #tpu.memory_space<vmem>>, vector<1x512xf32>
    %c0_5 = arith.constant 0 : index
    %c0_6 = arith.constant 0 : index
    %3 = vector.load %arg3[%c0_5, %c0_6] : memref<128x512xf32, #tpu.memory_space<vmem>>, vector<128x512xf32>
    %c0_7 = arith.constant 0 : index
    %c0_8 = arith.constant 0 : index
    %4 = vector.load %arg4[%c0_7, %c0_8] : memref<128x128xf32, #tpu.memory_space<vmem>>, vector<128x128xf32>
    %c0_9 = arith.constant 0 : index
    %c0_10 = arith.constant 0 : index
    %5 = vector.load %arg5[%c0_9, %c0_10] : memref<1x128xf32, #tpu.memory_space<vmem>>, vector<1x128xf32>
    %6 = tpu.iota {dimensions = array<i32: 1>} : vector<64x128xi32>
    %7 = vector.broadcast %0 : vector<64x1xi32> to vector<64x128xi32>
    %8 = arith.cmpi eq, %6, %7 : vector<64x128xi32>
    %9 = arith.extui %8 : vector<64x128xi1> to vector<64x128xi32>
    %10 = arith.sitofp %9 : vector<64x128xi32> to vector<64x128xf32>
    %cst = arith.constant dense<0.000000e+00> : vector<64x512xf32>
    %11 = tpu.matmul %10, %1, %cst {dimension_numbers = #tpu.dot_dimension_numbers<[1], [0], [0], [1], [0, 0, 1, 1], [], []>} : vector<64x128xf32>, vector<128x512xf32>, vector<64x512xf32> -> vector<64x512xf32>
    %12 = vector.broadcast %2 : vector<1x512xf32> to vector<64x512xf32>
    %13 = arith.addf %11, %12 : vector<64x512xf32>
    %cst_11 = arith.constant 0.000000e+00 : f32
    %14 = vector.broadcast %cst_11 : f32 to vector<8x128xf32>
    %cst_12 = arith.constant 0.000000e+00 : f32
    %15 = vector.broadcast %cst_12 : f32 to vector<8x128xf32>
    %16 = vector.extract_strided_slice %13 {offsets = [0, 0], sizes = [8, 512], strides = [1, 1]} : vector<64x512xf32> to vector<8x512xf32>
    %cst_13 = arith.constant dense<0.000000e+00> : vector<8x512xf32>
    %17 = tpu.matmul %14, %3, %cst_13 {dimension_numbers = #tpu.dot_dimension_numbers<[1], [0], [0], [1], [0, 0, 1, 1], [], []>} : vector<8x128xf32>, vector<128x512xf32>, vector<8x512xf32> -> vector<8x512xf32>
    %18 = arith.addf %16, %17 : vector<8x512xf32>
    %19 = vector.extract_strided_slice %18 {offsets = [0, 0], sizes = [8, 128], strides = [1, 1]} : vector<8x512xf32> to vector<8x128xf32>
    %cst_14 = arith.constant 5.000000e-01 : f32
    %20 = vector.broadcast %cst_14 : f32 to vector<8x128xf32>
    %21 = arith.mulf %20, %19 : vector<8x128xf32>
    %22 = math.tanh %21 : vector<8x128xf32>
    %cst_15 = arith.constant 1.000000e+00 : f32
    %23 = vector.broadcast %cst_15 : f32 to vector<8x128xf32>
    %24 = arith.addf %22, %23 : vector<8x128xf32>
    %cst_16 = arith.constant 5.000000e-01 : f32
    %25 = vector.broadcast %cst_16 : f32 to vector<8x128xf32>
    %26 = arith.mulf %25, %24 : vector<8x128xf32>
    %27 = vector.extract_strided_slice %18 {offsets = [0, 128], sizes = [8, 128], strides = [1, 1]} : vector<8x512xf32> to vector<8x128xf32>
    %cst_17 = arith.constant 5.000000e-01 : f32
    %28 = vector.broadcast %cst_17 : f32 to vector<8x128xf32>
    %29 = arith.mulf %28, %27 : vector<8x128xf32>
    %30 = math.tanh %29 : vector<8x128xf32>
    %cst_18 = arith.constant 1.000000e+00 : f32
    %31 = vector.broadcast %cst_18 : f32 to vector<8x128xf32>
    %32 = arith.addf %30, %31 : vector<8x128xf32>
    %cst_19 = arith.constant 5.000000e-01 : f32
    %33 = vector.broadcast %cst_19 : f32 to vector<8x128xf32>
    %34 = arith.mulf %33, %32 : vector<8x128xf32>
    %35 = vector.extract_strided_slice %18 {offsets = [0, 256], sizes = [8, 128], strides = [1, 1]} : vector<8x512xf32> to vector<8x128xf32>
    %36 = math.tanh %35 : vector<8x128xf32>
    %37 = vector.extract_strided_slice %18 {offsets = [0, 384], sizes = [8, 128], strides = [1, 1]} : vector<8x512xf32> to vector<8x128xf32>
    %cst_20 = arith.constant 5.000000e-01 : f32
    %38 = vector.broadcast %cst_20 : f32 to vector<8x128xf32>
    %39 = arith.mulf %38, %37 : vector<8x128xf32>
    %40 = math.tanh %39 : vector<8x128xf32>
    %cst_21 = arith.constant 1.000000e+00 : f32
    %41 = vector.broadcast %cst_21 : f32 to vector<8x128xf32>
    %42 = arith.addf %40, %41 : vector<8x128xf32>
    %cst_22 = arith.constant 5.000000e-01 : f32
    %43 = vector.broadcast %cst_22 : f32 to vector<8x128xf32>
    %44 = arith.mulf %43, %42 : vector<8x128xf32>
    %45 = arith.mulf %34, %15 : vector<8x128xf32>
    %46 = arith.mulf %26, %36 : vector<8x128xf32>
    %47 = arith.addf %45, %46 : vector<8x128xf32>
    %48 = math.tanh %47 : vector<8x128xf32>
    %49 = arith.mulf %44, %48 : vector<8x128xf32>
    %50 = vector.extract_strided_slice %13 {offsets = [8, 0], sizes = [8, 512], strides = [1, 1]} : vector<64x512xf32> to vector<8x512xf32>
    %cst_23 = arith.constant dense<0.000000e+00> : vector<8x512xf32>
    %51 = tpu.matmul %49, %3, %cst_23 {dimension_numbers = #tpu.dot_dimension_numbers<[1], [0], [0], [1], [0, 0, 1, 1], [], []>} : vector<8x128xf32>, vector<128x512xf32>, vector<8x512xf32> -> vector<8x512xf32>
    %52 = arith.addf %50, %51 : vector<8x512xf32>
    %53 = vector.extract_strided_slice %52 {offsets = [0, 0], sizes = [8, 128], strides = [1, 1]} : vector<8x512xf32> to vector<8x128xf32>
    %cst_24 = arith.constant 5.000000e-01 : f32
    %54 = vector.broadcast %cst_24 : f32 to vector<8x128xf32>
    %55 = arith.mulf %54, %53 : vector<8x128xf32>
    %56 = math.tanh %55 : vector<8x128xf32>
    %cst_25 = arith.constant 1.000000e+00 : f32
    %57 = vector.broadcast %cst_25 : f32 to vector<8x128xf32>
    %58 = arith.addf %56, %57 : vector<8x128xf32>
    %cst_26 = arith.constant 5.000000e-01 : f32
    %59 = vector.broadcast %cst_26 : f32 to vector<8x128xf32>
    %60 = arith.mulf %59, %58 : vector<8x128xf32>
    %61 = vector.extract_strided_slice %52 {offsets = [0, 128], sizes = [8, 128], strides = [1, 1]} : vector<8x512xf32> to vector<8x128xf32>
    %cst_27 = arith.constant 5.000000e-01 : f32
    %62 = vector.broadcast %cst_27 : f32 to vector<8x128xf32>
    %63 = arith.mulf %62, %61 : vector<8x128xf32>
    %64 = math.tanh %63 : vector<8x128xf32>
    %cst_28 = arith.constant 1.000000e+00 : f32
    %65 = vector.broadcast %cst_28 : f32 to vector<8x128xf32>
    %66 = arith.addf %64, %65 : vector<8x128xf32>
    %cst_29 = arith.constant 5.000000e-01 : f32
    %67 = vector.broadcast %cst_29 : f32 to vector<8x128xf32>
    %68 = arith.mulf %67, %66 : vector<8x128xf32>
    %69 = vector.extract_strided_slice %52 {offsets = [0, 256], sizes = [8, 128], strides = [1, 1]} : vector<8x512xf32> to vector<8x128xf32>
    %70 = math.tanh %69 : vector<8x128xf32>
    %71 = vector.extract_strided_slice %52 {offsets = [0, 384], sizes = [8, 128], strides = [1, 1]} : vector<8x512xf32> to vector<8x128xf32>
    %cst_30 = arith.constant 5.000000e-01 : f32
    %72 = vector.broadcast %cst_30 : f32 to vector<8x128xf32>
    %73 = arith.mulf %72, %71 : vector<8x128xf32>
    %74 = math.tanh %73 : vector<8x128xf32>
    %cst_31 = arith.constant 1.000000e+00 : f32
    %75 = vector.broadcast %cst_31 : f32 to vector<8x128xf32>
    %76 = arith.addf %74, %75 : vector<8x128xf32>
    %cst_32 = arith.constant 5.000000e-01 : f32
    %77 = vector.broadcast %cst_32 : f32 to vector<8x128xf32>
    %78 = arith.mulf %77, %76 : vector<8x128xf32>
    %79 = arith.mulf %68, %47 : vector<8x128xf32>
    %80 = arith.mulf %60, %70 : vector<8x128xf32>
    %81 = arith.addf %79, %80 : vector<8x128xf32>
    %82 = math.tanh %81 : vector<8x128xf32>
    %83 = arith.mulf %78, %82 : vector<8x128xf32>
    %84 = vector.extract_strided_slice %13 {offsets = [16, 0], sizes = [8, 512], strides = [1, 1]} : vector<64x512xf32> to vector<8x512xf32>
    %cst_33 = arith.constant dense<0.000000e+00> : vector<8x512xf32>
    %85 = tpu.matmul %83, %3, %cst_33 {dimension_numbers = #tpu.dot_dimension_numbers<[1], [0], [0], [1], [0, 0, 1, 1], [], []>} : vector<8x128xf32>, vector<128x512xf32>, vector<8x512xf32> -> vector<8x512xf32>
    %86 = arith.addf %84, %85 : vector<8x512xf32>
    %87 = vector.extract_strided_slice %86 {offsets = [0, 0], sizes = [8, 128], strides = [1, 1]} : vector<8x512xf32> to vector<8x128xf32>
    %cst_34 = arith.constant 5.000000e-01 : f32
    %88 = vector.broadcast %cst_34 : f32 to vector<8x128xf32>
    %89 = arith.mulf %88, %87 : vector<8x128xf32>
    %90 = math.tanh %89 : vector<8x128xf32>
    %cst_35 = arith.constant 1.000000e+00 : f32
    %91 = vector.broadcast %cst_35 : f32 to vector<8x128xf32>
    %92 = arith.addf %90, %91 : vector<8x128xf32>
    %cst_36 = arith.constant 5.000000e-01 : f32
    %93 = vector.broadcast %cst_36 : f32 to vector<8x128xf32>
    %94 = arith.mulf %93, %92 : vector<8x128xf32>
    %95 = vector.extract_strided_slice %86 {offsets = [0, 128], sizes = [8, 128], strides = [1, 1]} : vector<8x512xf32> to vector<8x128xf32>
    %cst_37 = arith.constant 5.000000e-01 : f32
    %96 = vector.broadcast %cst_37 : f32 to vector<8x128xf32>
    %97 = arith.mulf %96, %95 : vector<8x128xf32>
    %98 = math.tanh %97 : vector<8x128xf32>
    %cst_38 = arith.constant 1.000000e+00 : f32
    %99 = vector.broadcast %cst_38 : f32 to vector<8x128xf32>
    %100 = arith.addf %98, %99 : vector<8x128xf32>
    %cst_39 = arith.constant 5.000000e-01 : f32
    %101 = vector.broadcast %cst_39 : f32 to vector<8x128xf32>
    %102 = arith.mulf %101, %100 : vector<8x128xf32>
    %103 = vector.extract_strided_slice %86 {offsets = [0, 256], sizes = [8, 128], strides = [1, 1]} : vector<8x512xf32> to vector<8x128xf32>
    %104 = math.tanh %103 : vector<8x128xf32>
    %105 = vector.extract_strided_slice %86 {offsets = [0, 384], sizes = [8, 128], strides = [1, 1]} : vector<8x512xf32> to vector<8x128xf32>
    %cst_40 = arith.constant 5.000000e-01 : f32
    %106 = vector.broadcast %cst_40 : f32 to vector<8x128xf32>
    %107 = arith.mulf %106, %105 : vector<8x128xf32>
    %108 = math.tanh %107 : vector<8x128xf32>
    %cst_41 = arith.constant 1.000000e+00 : f32
    %109 = vector.broadcast %cst_41 : f32 to vector<8x128xf32>
    %110 = arith.addf %108, %109 : vector<8x128xf32>
    %cst_42 = arith.constant 5.000000e-01 : f32
    %111 = vector.broadcast %cst_42 : f32 to vector<8x128xf32>
    %112 = arith.mulf %111, %110 : vector<8x128xf32>
    %113 = arith.mulf %102, %81 : vector<8x128xf32>
    %114 = arith.mulf %94, %104 : vector<8x128xf32>
    %115 = arith.addf %113, %114 : vector<8x128xf32>
    %116 = math.tanh %115 : vector<8x128xf32>
    %117 = arith.mulf %112, %116 : vector<8x128xf32>
    %118 = vector.extract_strided_slice %13 {offsets = [24, 0], sizes = [8, 512], strides = [1, 1]} : vector<64x512xf32> to vector<8x512xf32>
    %cst_43 = arith.constant dense<0.000000e+00> : vector<8x512xf32>
    %119 = tpu.matmul %117, %3, %cst_43 {dimension_numbers = #tpu.dot_dimension_numbers<[1], [0], [0], [1], [0, 0, 1, 1], [], []>} : vector<8x128xf32>, vector<128x512xf32>, vector<8x512xf32> -> vector<8x512xf32>
    %120 = arith.addf %118, %119 : vector<8x512xf32>
    %121 = vector.extract_strided_slice %120 {offsets = [0, 0], sizes = [8, 128], strides = [1, 1]} : vector<8x512xf32> to vector<8x128xf32>
    %cst_44 = arith.constant 5.000000e-01 : f32
    %122 = vector.broadcast %cst_44 : f32 to vector<8x128xf32>
    %123 = arith.mulf %122, %121 : vector<8x128xf32>
    %124 = math.tanh %123 : vector<8x128xf32>
    %cst_45 = arith.constant 1.000000e+00 : f32
    %125 = vector.broadcast %cst_45 : f32 to vector<8x128xf32>
    %126 = arith.addf %124, %125 : vector<8x128xf32>
    %cst_46 = arith.constant 5.000000e-01 : f32
    %127 = vector.broadcast %cst_46 : f32 to vector<8x128xf32>
    %128 = arith.mulf %127, %126 : vector<8x128xf32>
    %129 = vector.extract_strided_slice %120 {offsets = [0, 128], sizes = [8, 128], strides = [1, 1]} : vector<8x512xf32> to vector<8x128xf32>
    %cst_47 = arith.constant 5.000000e-01 : f32
    %130 = vector.broadcast %cst_47 : f32 to vector<8x128xf32>
    %131 = arith.mulf %130, %129 : vector<8x128xf32>
    %132 = math.tanh %131 : vector<8x128xf32>
    %cst_48 = arith.constant 1.000000e+00 : f32
    %133 = vector.broadcast %cst_48 : f32 to vector<8x128xf32>
    %134 = arith.addf %132, %133 : vector<8x128xf32>
    %cst_49 = arith.constant 5.000000e-01 : f32
    %135 = vector.broadcast %cst_49 : f32 to vector<8x128xf32>
    %136 = arith.mulf %135, %134 : vector<8x128xf32>
    %137 = vector.extract_strided_slice %120 {offsets = [0, 256], sizes = [8, 128], strides = [1, 1]} : vector<8x512xf32> to vector<8x128xf32>
    %138 = math.tanh %137 : vector<8x128xf32>
    %139 = vector.extract_strided_slice %120 {offsets = [0, 384], sizes = [8, 128], strides = [1, 1]} : vector<8x512xf32> to vector<8x128xf32>
    %cst_50 = arith.constant 5.000000e-01 : f32
    %140 = vector.broadcast %cst_50 : f32 to vector<8x128xf32>
    %141 = arith.mulf %140, %139 : vector<8x128xf32>
    %142 = math.tanh %141 : vector<8x128xf32>
    %cst_51 = arith.constant 1.000000e+00 : f32
    %143 = vector.broadcast %cst_51 : f32 to vector<8x128xf32>
    %144 = arith.addf %142, %143 : vector<8x128xf32>
    %cst_52 = arith.constant 5.000000e-01 : f32
    %145 = vector.broadcast %cst_52 : f32 to vector<8x128xf32>
    %146 = arith.mulf %145, %144 : vector<8x128xf32>
    %147 = arith.mulf %136, %115 : vector<8x128xf32>
    %148 = arith.mulf %128, %138 : vector<8x128xf32>
    %149 = arith.addf %147, %148 : vector<8x128xf32>
    %150 = math.tanh %149 : vector<8x128xf32>
    %151 = arith.mulf %146, %150 : vector<8x128xf32>
    %152 = vector.extract_strided_slice %13 {offsets = [32, 0], sizes = [8, 512], strides = [1, 1]} : vector<64x512xf32> to vector<8x512xf32>
    %cst_53 = arith.constant dense<0.000000e+00> : vector<8x512xf32>
    %153 = tpu.matmul %151, %3, %cst_53 {dimension_numbers = #tpu.dot_dimension_numbers<[1], [0], [0], [1], [0, 0, 1, 1], [], []>} : vector<8x128xf32>, vector<128x512xf32>, vector<8x512xf32> -> vector<8x512xf32>
    %154 = arith.addf %152, %153 : vector<8x512xf32>
    %155 = vector.extract_strided_slice %154 {offsets = [0, 0], sizes = [8, 128], strides = [1, 1]} : vector<8x512xf32> to vector<8x128xf32>
    %cst_54 = arith.constant 5.000000e-01 : f32
    %156 = vector.broadcast %cst_54 : f32 to vector<8x128xf32>
    %157 = arith.mulf %156, %155 : vector<8x128xf32>
    %158 = math.tanh %157 : vector<8x128xf32>
    %cst_55 = arith.constant 1.000000e+00 : f32
    %159 = vector.broadcast %cst_55 : f32 to vector<8x128xf32>
    %160 = arith.addf %158, %159 : vector<8x128xf32>
    %cst_56 = arith.constant 5.000000e-01 : f32
    %161 = vector.broadcast %cst_56 : f32 to vector<8x128xf32>
    %162 = arith.mulf %161, %160 : vector<8x128xf32>
    %163 = vector.extract_strided_slice %154 {offsets = [0, 128], sizes = [8, 128], strides = [1, 1]} : vector<8x512xf32> to vector<8x128xf32>
    %cst_57 = arith.constant 5.000000e-01 : f32
    %164 = vector.broadcast %cst_57 : f32 to vector<8x128xf32>
    %165 = arith.mulf %164, %163 : vector<8x128xf32>
    %166 = math.tanh %165 : vector<8x128xf32>
    %cst_58 = arith.constant 1.000000e+00 : f32
    %167 = vector.broadcast %cst_58 : f32 to vector<8x128xf32>
    %168 = arith.addf %166, %167 : vector<8x128xf32>
    %cst_59 = arith.constant 5.000000e-01 : f32
    %169 = vector.broadcast %cst_59 : f32 to vector<8x128xf32>
    %170 = arith.mulf %169, %168 : vector<8x128xf32>
    %171 = vector.extract_strided_slice %154 {offsets = [0, 256], sizes = [8, 128], strides = [1, 1]} : vector<8x512xf32> to vector<8x128xf32>
    %172 = math.tanh %171 : vector<8x128xf32>
    %173 = vector.extract_strided_slice %154 {offsets = [0, 384], sizes = [8, 128], strides = [1, 1]} : vector<8x512xf32> to vector<8x128xf32>
    %cst_60 = arith.constant 5.000000e-01 : f32
    %174 = vector.broadcast %cst_60 : f32 to vector<8x128xf32>
    %175 = arith.mulf %174, %173 : vector<8x128xf32>
    %176 = math.tanh %175 : vector<8x128xf32>
    %cst_61 = arith.constant 1.000000e+00 : f32
    %177 = vector.broadcast %cst_61 : f32 to vector<8x128xf32>
    %178 = arith.addf %176, %177 : vector<8x128xf32>
    %cst_62 = arith.constant 5.000000e-01 : f32
    %179 = vector.broadcast %cst_62 : f32 to vector<8x128xf32>
    %180 = arith.mulf %179, %178 : vector<8x128xf32>
    %181 = arith.mulf %170, %149 : vector<8x128xf32>
    %182 = arith.mulf %162, %172 : vector<8x128xf32>
    %183 = arith.addf %181, %182 : vector<8x128xf32>
    %184 = math.tanh %183 : vector<8x128xf32>
    %185 = arith.mulf %180, %184 : vector<8x128xf32>
    %186 = vector.extract_strided_slice %13 {offsets = [40, 0], sizes = [8, 512], strides = [1, 1]} : vector<64x512xf32> to vector<8x512xf32>
    %cst_63 = arith.constant dense<0.000000e+00> : vector<8x512xf32>
    %187 = tpu.matmul %185, %3, %cst_63 {dimension_numbers = #tpu.dot_dimension_numbers<[1], [0], [0], [1], [0, 0, 1, 1], [], []>} : vector<8x128xf32>, vector<128x512xf32>, vector<8x512xf32> -> vector<8x512xf32>
    %188 = arith.addf %186, %187 : vector<8x512xf32>
    %189 = vector.extract_strided_slice %188 {offsets = [0, 0], sizes = [8, 128], strides = [1, 1]} : vector<8x512xf32> to vector<8x128xf32>
    %cst_64 = arith.constant 5.000000e-01 : f32
    %190 = vector.broadcast %cst_64 : f32 to vector<8x128xf32>
    %191 = arith.mulf %190, %189 : vector<8x128xf32>
    %192 = math.tanh %191 : vector<8x128xf32>
    %cst_65 = arith.constant 1.000000e+00 : f32
    %193 = vector.broadcast %cst_65 : f32 to vector<8x128xf32>
    %194 = arith.addf %192, %193 : vector<8x128xf32>
    %cst_66 = arith.constant 5.000000e-01 : f32
    %195 = vector.broadcast %cst_66 : f32 to vector<8x128xf32>
    %196 = arith.mulf %195, %194 : vector<8x128xf32>
    %197 = vector.extract_strided_slice %188 {offsets = [0, 128], sizes = [8, 128], strides = [1, 1]} : vector<8x512xf32> to vector<8x128xf32>
    %cst_67 = arith.constant 5.000000e-01 : f32
    %198 = vector.broadcast %cst_67 : f32 to vector<8x128xf32>
    %199 = arith.mulf %198, %197 : vector<8x128xf32>
    %200 = math.tanh %199 : vector<8x128xf32>
    %cst_68 = arith.constant 1.000000e+00 : f32
    %201 = vector.broadcast %cst_68 : f32 to vector<8x128xf32>
    %202 = arith.addf %200, %201 : vector<8x128xf32>
    %cst_69 = arith.constant 5.000000e-01 : f32
    %203 = vector.broadcast %cst_69 : f32 to vector<8x128xf32>
    %204 = arith.mulf %203, %202 : vector<8x128xf32>
    %205 = vector.extract_strided_slice %188 {offsets = [0, 256], sizes = [8, 128], strides = [1, 1]} : vector<8x512xf32> to vector<8x128xf32>
    %206 = math.tanh %205 : vector<8x128xf32>
    %207 = vector.extract_strided_slice %188 {offsets = [0, 384], sizes = [8, 128], strides = [1, 1]} : vector<8x512xf32> to vector<8x128xf32>
    %cst_70 = arith.constant 5.000000e-01 : f32
    %208 = vector.broadcast %cst_70 : f32 to vector<8x128xf32>
    %209 = arith.mulf %208, %207 : vector<8x128xf32>
    %210 = math.tanh %209 : vector<8x128xf32>
    %cst_71 = arith.constant 1.000000e+00 : f32
    %211 = vector.broadcast %cst_71 : f32 to vector<8x128xf32>
    %212 = arith.addf %210, %211 : vector<8x128xf32>
    %cst_72 = arith.constant 5.000000e-01 : f32
    %213 = vector.broadcast %cst_72 : f32 to vector<8x128xf32>
    %214 = arith.mulf %213, %212 : vector<8x128xf32>
    %215 = arith.mulf %204, %183 : vector<8x128xf32>
    %216 = arith.mulf %196, %206 : vector<8x128xf32>
    %217 = arith.addf %215, %216 : vector<8x128xf32>
    %218 = math.tanh %217 : vector<8x128xf32>
    %219 = arith.mulf %214, %218 : vector<8x128xf32>
    %220 = vector.extract_strided_slice %13 {offsets = [48, 0], sizes = [8, 512], strides = [1, 1]} : vector<64x512xf32> to vector<8x512xf32>
    %cst_73 = arith.constant dense<0.000000e+00> : vector<8x512xf32>
    %221 = tpu.matmul %219, %3, %cst_73 {dimension_numbers = #tpu.dot_dimension_numbers<[1], [0], [0], [1], [0, 0, 1, 1], [], []>} : vector<8x128xf32>, vector<128x512xf32>, vector<8x512xf32> -> vector<8x512xf32>
    %222 = arith.addf %220, %221 : vector<8x512xf32>
    %223 = vector.extract_strided_slice %222 {offsets = [0, 0], sizes = [8, 128], strides = [1, 1]} : vector<8x512xf32> to vector<8x128xf32>
    %cst_74 = arith.constant 5.000000e-01 : f32
    %224 = vector.broadcast %cst_74 : f32 to vector<8x128xf32>
    %225 = arith.mulf %224, %223 : vector<8x128xf32>
    %226 = math.tanh %225 : vector<8x128xf32>
    %cst_75 = arith.constant 1.000000e+00 : f32
    %227 = vector.broadcast %cst_75 : f32 to vector<8x128xf32>
    %228 = arith.addf %226, %227 : vector<8x128xf32>
    %cst_76 = arith.constant 5.000000e-01 : f32
    %229 = vector.broadcast %cst_76 : f32 to vector<8x128xf32>
    %230 = arith.mulf %229, %228 : vector<8x128xf32>
    %231 = vector.extract_strided_slice %222 {offsets = [0, 128], sizes = [8, 128], strides = [1, 1]} : vector<8x512xf32> to vector<8x128xf32>
    %cst_77 = arith.constant 5.000000e-01 : f32
    %232 = vector.broadcast %cst_77 : f32 to vector<8x128xf32>
    %233 = arith.mulf %232, %231 : vector<8x128xf32>
    %234 = math.tanh %233 : vector<8x128xf32>
    %cst_78 = arith.constant 1.000000e+00 : f32
    %235 = vector.broadcast %cst_78 : f32 to vector<8x128xf32>
    %236 = arith.addf %234, %235 : vector<8x128xf32>
    %cst_79 = arith.constant 5.000000e-01 : f32
    %237 = vector.broadcast %cst_79 : f32 to vector<8x128xf32>
    %238 = arith.mulf %237, %236 : vector<8x128xf32>
    %239 = vector.extract_strided_slice %222 {offsets = [0, 256], sizes = [8, 128], strides = [1, 1]} : vector<8x512xf32> to vector<8x128xf32>
    %240 = math.tanh %239 : vector<8x128xf32>
    %241 = vector.extract_strided_slice %222 {offsets = [0, 384], sizes = [8, 128], strides = [1, 1]} : vector<8x512xf32> to vector<8x128xf32>
    %cst_80 = arith.constant 5.000000e-01 : f32
    %242 = vector.broadcast %cst_80 : f32 to vector<8x128xf32>
    %243 = arith.mulf %242, %241 : vector<8x128xf32>
    %244 = math.tanh %243 : vector<8x128xf32>
    %cst_81 = arith.constant 1.000000e+00 : f32
    %245 = vector.broadcast %cst_81 : f32 to vector<8x128xf32>
    %246 = arith.addf %244, %245 : vector<8x128xf32>
    %cst_82 = arith.constant 5.000000e-01 : f32
    %247 = vector.broadcast %cst_82 : f32 to vector<8x128xf32>
    %248 = arith.mulf %247, %246 : vector<8x128xf32>
    %249 = arith.mulf %238, %217 : vector<8x128xf32>
    %250 = arith.mulf %230, %240 : vector<8x128xf32>
    %251 = arith.addf %249, %250 : vector<8x128xf32>
    %252 = math.tanh %251 : vector<8x128xf32>
    %253 = arith.mulf %248, %252 : vector<8x128xf32>
    %254 = vector.extract_strided_slice %13 {offsets = [56, 0], sizes = [8, 512], strides = [1, 1]} : vector<64x512xf32> to vector<8x512xf32>
    %cst_83 = arith.constant dense<0.000000e+00> : vector<8x512xf32>
    %255 = tpu.matmul %253, %3, %cst_83 {dimension_numbers = #tpu.dot_dimension_numbers<[1], [0], [0], [1], [0, 0, 1, 1], [], []>} : vector<8x128xf32>, vector<128x512xf32>, vector<8x512xf32> -> vector<8x512xf32>
    %256 = arith.addf %254, %255 : vector<8x512xf32>
    %257 = vector.extract_strided_slice %256 {offsets = [0, 0], sizes = [8, 128], strides = [1, 1]} : vector<8x512xf32> to vector<8x128xf32>
    %cst_84 = arith.constant 5.000000e-01 : f32
    %258 = vector.broadcast %cst_84 : f32 to vector<8x128xf32>
    %259 = arith.mulf %258, %257 : vector<8x128xf32>
    %260 = math.tanh %259 : vector<8x128xf32>
    %cst_85 = arith.constant 1.000000e+00 : f32
    %261 = vector.broadcast %cst_85 : f32 to vector<8x128xf32>
    %262 = arith.addf %260, %261 : vector<8x128xf32>
    %cst_86 = arith.constant 5.000000e-01 : f32
    %263 = vector.broadcast %cst_86 : f32 to vector<8x128xf32>
    %264 = arith.mulf %263, %262 : vector<8x128xf32>
    %265 = vector.extract_strided_slice %256 {offsets = [0, 128], sizes = [8, 128], strides = [1, 1]} : vector<8x512xf32> to vector<8x128xf32>
    %cst_87 = arith.constant 5.000000e-01 : f32
    %266 = vector.broadcast %cst_87 : f32 to vector<8x128xf32>
    %267 = arith.mulf %266, %265 : vector<8x128xf32>
    %268 = math.tanh %267 : vector<8x128xf32>
    %cst_88 = arith.constant 1.000000e+00 : f32
    %269 = vector.broadcast %cst_88 : f32 to vector<8x128xf32>
    %270 = arith.addf %268, %269 : vector<8x128xf32>
    %cst_89 = arith.constant 5.000000e-01 : f32
    %271 = vector.broadcast %cst_89 : f32 to vector<8x128xf32>
    %272 = arith.mulf %271, %270 : vector<8x128xf32>
    %273 = vector.extract_strided_slice %256 {offsets = [0, 256], sizes = [8, 128], strides = [1, 1]} : vector<8x512xf32> to vector<8x128xf32>
    %274 = math.tanh %273 : vector<8x128xf32>
    %275 = vector.extract_strided_slice %256 {offsets = [0, 384], sizes = [8, 128], strides = [1, 1]} : vector<8x512xf32> to vector<8x128xf32>
    %cst_90 = arith.constant 5.000000e-01 : f32
    %276 = vector.broadcast %cst_90 : f32 to vector<8x128xf32>
    %277 = arith.mulf %276, %275 : vector<8x128xf32>
    %278 = math.tanh %277 : vector<8x128xf32>
    %cst_91 = arith.constant 1.000000e+00 : f32
    %279 = vector.broadcast %cst_91 : f32 to vector<8x128xf32>
    %280 = arith.addf %278, %279 : vector<8x128xf32>
    %cst_92 = arith.constant 5.000000e-01 : f32
    %281 = vector.broadcast %cst_92 : f32 to vector<8x128xf32>
    %282 = arith.mulf %281, %280 : vector<8x128xf32>
    %283 = arith.mulf %272, %251 : vector<8x128xf32>
    %284 = arith.mulf %264, %274 : vector<8x128xf32>
    %285 = arith.addf %283, %284 : vector<8x128xf32>
    %286 = math.tanh %285 : vector<8x128xf32>
    %287 = arith.mulf %282, %286 : vector<8x128xf32>
    %cst_93 = arith.constant dense<0.000000e+00> : vector<8x128xf32>
    %288 = tpu.matmul %287, %4, %cst_93 {dimension_numbers = #tpu.dot_dimension_numbers<[1], [0], [0], [1], [0, 0, 1, 1], [], []>} : vector<8x128xf32>, vector<128x128xf32>, vector<8x128xf32> -> vector<8x128xf32>
    %289 = vector.broadcast %5 : vector<1x128xf32> to vector<8x128xf32>
    %290 = arith.addf %288, %289 : vector<8x128xf32>
    %cst_94 = arith.constant 5.000000e-01 : f32
    %291 = vector.broadcast %cst_94 : f32 to vector<8x128xf32>
    %292 = arith.mulf %291, %290 : vector<8x128xf32>
    %293 = math.tanh %292 : vector<8x128xf32>
    %cst_95 = arith.constant 1.000000e+00 : f32
    %294 = vector.broadcast %cst_95 : f32 to vector<8x128xf32>
    %295 = arith.addf %293, %294 : vector<8x128xf32>
    %cst_96 = arith.constant 5.000000e-01 : f32
    %296 = vector.broadcast %cst_96 : f32 to vector<8x128xf32>
    %297 = arith.mulf %296, %295 : vector<8x128xf32>
    %c0_97 = arith.constant 0 : index
    %c0_98 = arith.constant 0 : index
    %298 = vector.load %arg6[%c0_97, %c0_98] : memref<8x128xf32, #tpu.memory_space<vmem>>, vector<8x128xf32>
    tpu.vector_store %arg6[%c0_97, %c0_98], %297 {strides = array<i32>} : memref<8x128xf32, #tpu.memory_space<vmem>>, vector<8x128xf32>,
    return
  }
}

</mosaic_0001>

<llo_original>
// kernel: tpu_custom_call.1
$region0: #{tpu_custom_call.1}
  #allocation0 [shape = 'u32[]', space=smem, size = 0x4, offset = 0x4, fixed_abs, tag = 'smem constant byte address 0x4 - core index']
  #allocation1 [shape = 'u32[72,128]{1,0:T(1,128)}', space=vmem, size = 0x9000, scoped, tag = 'internal scratch']
  %s0 = inlined_call_operand.vmem [shape: s32[64,1], index: 0, kind: input, shape index: {}]
  %s1 = inlined_call_operand.hbm [shape: f32[128,512], index: 1, kind: input, shape index: {}]
  %s2 = inlined_call_operand.vmem [shape: f32[1,512], index: 2, kind: input, shape index: {}]
  %s3 = inlined_call_operand.hbm [shape: f32[128,512], index: 3, kind: input, shape index: {}]
  %s4 = inlined_call_operand.hbm [shape: f32[128,128], index: 4, kind: input, shape index: {}]
  %s5 = inlined_call_operand.vmem [shape: f32[1,128], index: 5, kind: input, shape index: {}]
  %s6 = inlined_call_operand.hbm [shape: f32[8,128], index: 6, kind: output, shape index: {}]
  %s7 = sld [smem:[#allocation0]]
  $region46: #{tpu_custom_call.1} parent=0
    _
  %s9 = ssub.s32 1, %s7
  %s10 = scalar_select 0, %s9, %s7
  $region1: #{tpu_custom_call.1} parent=0
    #allocation2 [shape = 'u8[262144]{0}', space=vmem, size = 0x40000, scoped, tag = 'input window, operand 1, single buffered']
    #allocation3 [shape = 's32[1]{0}', space=sflag, size = 0x4, scoped, tag = 'scoped memory for tpu_custom_call.1']
    #allocation4 [shape = 's32[1]{0}', space=sflag, size = 0x4, scoped, tag = 'scoped memory for tpu_custom_call.1']
    #allocation5 [shape = 'u8[262144]{0}', space=vmem, size = 0x40000, scoped, tag = 'input window, operand 3, single buffered']
    #allocation6 [shape = 's32[1]{0}', space=sflag, size = 0x4, scoped, tag = 'scoped memory for tpu_custom_call.1']
    #allocation7 [shape = 'u8[65536]{0}', space=vmem, size = 0x10000, scoped, tag = 'input window, operand 4, single buffered']
    #allocation8 [shape = 'u8[4096]{0}', space=vmem, size = 0x1000, scoped, tag = 'output window, operand 0, single buffered']
    %11 = vsyncpa [#allocation3], 0
    %12 = vsyncpa [#allocation6], 0
    %13 = vsyncpa [#allocation4], 0
    // Predicated region
    $region2: #{tpu_custom_call.1} parent=1 // pred_check
      _
    $region3: #{tpu_custom_call.1} parent=1 // pred_check_branch
      %15 = sbr.rel (0) target = $region5
    $region4: #{tpu_custom_call.1} parent=1 // pred_region
      _
    $region5: #{tpu_custom_call.1} parent=1 // pred_fallthru
      _
    // Predicated region
    $region6: #{tpu_custom_call.1} parent=1 // pred_check
      _
    $region7: #{tpu_custom_call.1} parent=1 // pred_check_branch
      %17 = sbr.rel (0) target = $region9
    $region8: #{tpu_custom_call.1} parent=1 // pred_region
      %19 = vsyncadd [#allocation3], 0
      %s20 = sshll.u32 %s1, 4
      %s21 = int_to_ptr.hbm [resolvable:$true] %s20
      %s22 = sshll.u32 [#allocation2], 4
      %s23 = int_to_ptr.vmem [resolvable:$true] %s22
      %28 = dma.hbm_to_vmem [thread:$0]  %s21, 8192, %s23, [#allocation3], 512, 512, 32
    $region9: #{tpu_custom_call.1} parent=1 // pred_fallthru
      _
    // Predicated region
    $region10: #{tpu_custom_call.1} parent=1 // pred_check
      _
    $region11: #{tpu_custom_call.1} parent=1 // pred_check_branch
      %30 = sbr.rel (0) target = $region13
    $region12: #{tpu_custom_call.1} parent=1 // pred_region
      _
    $region13: #{tpu_custom_call.1} parent=1 // pred_fallthru
      _
    // Predicated region
    $region14: #{tpu_custom_call.1} parent=1 // pred_check
      _
    $region15: #{tpu_custom_call.1} parent=1 // pred_check_branch
      %32 = sbr.rel (0) target = $region17
    $region16: #{tpu_custom_call.1} parent=1 // pred_region
      %34 = vsyncadd [#allocation6], 0
      %s35 = sshll.u32 %s3, 4
      %s36 = int_to_ptr.hbm [resolvable:$true] %s35
      %s37 = sshll.u32 [#allocation5], 4
      %s38 = int_to_ptr.vmem [resolvable:$true] %s37
      %43 = dma.hbm_to_vmem [thread:$0]  %s36, 8192, %s38, [#allocation6], 512, 512, 32
    $region17: #{tpu_custom_call.1} parent=1 // pred_fallthru
      _
    // Predicated region
    $region18: #{tpu_custom_call.1} parent=1 // pred_check
      _
    $region19: #{tpu_custom_call.1} parent=1 // pred_check_branch
      %45 = sbr.rel (0) target = $region21
    $region20: #{tpu_custom_call.1} parent=1 // pred_region
      %47 = vsyncadd [#allocation6], 0
      %s48 = sshll.u32 %s4, 4
      %s49 = int_to_ptr.hbm [resolvable:$true] %s48
      %s50 = sshll.u32 [#allocation7], 4
      %s51 = int_to_ptr.vmem [resolvable:$true] %s50
      %56 = dma.hbm_to_vmem [thread:$0]  %s49, 2048, %s51, [#allocation6], 128, 128, 8
    $region21: #{tpu_custom_call.1} parent=1 // pred_fallthru
      _
    // Predicated region
    $region22: #{tpu_custom_call.1} parent=1 // pred_check
      _
    $region23: #{tpu_custom_call.1} parent=1 // pred_check_branch
      %58 = sbr.rel (0) target = $region25
    $region24: #{tpu_custom_call.1} parent=1 // pred_region
      _
    $region25: #{tpu_custom_call.1} parent=1 // pred_fallthru
      _
    // Predicated region
    $region26: #{tpu_custom_call.1} parent=1 // pred_check
      _
    $region27: #{tpu_custom_call.1} parent=1 // pred_check_branch
      %60 = sbr.rel (0) target = $region29
    $region28: #{tpu_custom_call.1} parent=1 // pred_region
      %62 = dma.done [#allocation3], 8192
    $region29: #{tpu_custom_call.1} parent=1 // pred_fallthru
      _
    // Predicated region
    $region30: #{tpu_custom_call.1} parent=1 // pred_check
      _
    $region31: #{tpu_custom_call.1} parent=1 // pred_check_branch
      %64 = sbr.rel (0) target = $region33
    $region32: #{tpu_custom_call.1} parent=1 // pred_region
      %66 = dma.done [#allocation6], 8192
    $region33: #{tpu_custom_call.1} parent=1 // pred_fallthru
      _
    // Predicated region
    $region34: #{tpu_custom_call.1} parent=1 // pred_check
      _
    $region35: #{tpu_custom_call.1} parent=1 // pred_check_branch
      %68 = sbr.rel (0) target = $region37
    $region36: #{tpu_custom_call.1} parent=1 // pred_region
      %70 = dma.done [#allocation6], 2048
    $region37: #{tpu_custom_call.1} parent=1 // pred_fallthru
      _
    %v71 = vld [vmem:[%s0] sm:$0xff]
    %v72 = vld [vmem:[%s0 + $0x8] sm:$0xff]
    %v73 = vld [vmem:[%s0 + $0x10] sm:$0xff]
    %v74 = vld [vmem:[%s0 + $0x18] sm:$0xff]
    %v75 = vld [vmem:[%s0 + $0x20] sm:$0xff]
    %v76 = vld [vmem:[%s0 + $0x28] sm:$0xff]
    %v77 = vld [vmem:[%s0 + $0x30] sm:$0xff]
    %v78 = vld [vmem:[%s0 + $0x38] sm:$0xff]
    %v79 = vld [vmem:[#allocation2] sm:$0xff]
    %v80 = vld [vmem:[#allocation2 + $0x8] sm:$0xff]
    %v81 = vld [vmem:[#allocation2 + $0x10] sm:$0xff]
    %v82 = vld [vmem:[#allocation2 + $0x18] sm:$0xff]
    %v83 = vld [vmem:[#allocation2 + $0x20] sm:$0xff]
    %v84 = vld [vmem:[#allocation2 + $0x28] sm:$0xff]
    %v85 = vld [vmem:[#allocation2 + $0x30] sm:$0xff]
    %v86 = vld [vmem:[#allocation2 + $0x38] sm:$0xff]
    %v87 = vld [vmem:[#allocation2 + $0x40] sm:$0xff]
    %v88 = vld [vmem:[#allocation2 + $0x48] sm:$0xff]
    %v89 = vld [vmem:[#allocation2 + $0x50] sm:$0xff]
    %v90 = vld [vmem:[#allocation2 + $0x58] sm:$0xff]
    %v91 = vld [vmem:[#allocation2 + $0x60] sm:$0xff]
    %v92 = vld [vmem:[#allocation2 + $0x68] sm:$0xff]
    %v93 = vld [vmem:[#allocation2 + $0x70] sm:$0xff]
    %v94 = vld [vmem:[#allocation2 + $0x78] sm:$0xff]
    %v95 = vld [vmem:[#allocation2 + $0x80] sm:$0xff]
    %v96 = vld [vmem:[#allocation2 + $0x88] sm:$0xff]
    %v97 = vld [vmem:[#allocation2 + $0x90] sm:$0xff]
    %v98 = vld [vmem:[#allocation2 + $0x98] sm:$0xff]
    %v99 = vld [vmem:[#allocation2 + $0xa0] sm:$0xff]
    %v100 = vld [vmem:[#allocation2 + $0xa8] sm:$0xff]
    %v101 = vld [vmem:[#allocation2 + $0xb0] sm:$0xff]
    %v102 = vld [vmem:[#allocation2 + $0xb8] sm:$0xff]
    %v103 = vld [vmem:[#allocation2 + $0xc0] sm:$0xff]
    %v104 = vld [vmem:[#allocation2 + $0xc8] sm:$0xff]
    %v105 = vld [vmem:[#allocation2 + $0xd0] sm:$0xff]
    %v106 = vld [vmem:[#allocation2 + $0xd8] sm:$0xff]
    %v107 = vld [vmem:[#allocation2 + $0xe0] sm:$0xff]
    %v108 = vld [vmem:[#allocation2 + $0xe8] sm:$0xff]
    %v109 = vld [vmem:[#allocation2 + $0xf0] sm:$0xff]
    %v110 = vld [vmem:[#allocation2 + $0xf8] sm:$0xff]
    %v111 = vld [vmem:[#allocation2 + $0x100] sm:$0xff]
    %v112 = vld [vmem:[#allocation2 + $0x108] sm:$0xff]
    %v113 = vld [vmem:[#allocation2 + $0x110] sm:$0xff]
    %v114 = vld [vmem:[#allocation2 + $0x118] sm:$0xff]
    %v115 = vld [vmem:[#allocation2 + $0x120] sm:$0xff]
    %v116 = vld [vmem:[#allocation2 + $0x128] sm:$0xff]
    %v117 = vld [vmem:[#allocation2 + $0x130] sm:$0xff]
    %v118 = vld [vmem:[#allocation2 + $0x138] sm:$0xff]
    %v119 = vld [vmem:[#allocation2 + $0x140] sm:$0xff]
    %v120 = vld [vmem:[#allocation2 + $0x148] sm:$0xff]
    %v121 = vld [vmem:[#allocation2 + $0x150] sm:$0xff]
    %v122 = vld [vmem:[#allocation2 + $0x158] sm:$0xff]
    %v123 = vld [vmem:[#allocation2 + $0x160] sm:$0xff]
    %v124 = vld [vmem:[#allocation2 + $0x168] sm:$0xff]
    %v125 = vld [vmem:[#allocation2 + $0x170] sm:$0xff]
    %v126 = vld [vmem:[#allocation2 + $0x178] sm:$0xff]
    %v127 = vld [vmem:[#allocation2 + $0x180] sm:$0xff]
    %v128 = vld [vmem:[#allocation2 + $0x188] sm:$0xff]
    %v129 = vld [vmem:[#allocation2 + $0x190] sm:$0xff]
    %v130 = vld [vmem:[#allocation2 + $0x198] sm:$0xff]
    %v131 = vld [vmem:[#allocation2 + $0x1a0] sm:$0xff]
    %v132 = vld [vmem:[#allocation2 + $0x1a8] sm:$0xff]
    %v133 = vld [vmem:[#allocation2 + $0x1b0] sm:$0xff]
    %v134 = vld [vmem:[#allocation2 + $0x1b8] sm:$0xff]
    %v135 = vld [vmem:[#allocation2 + $0x1c0] sm:$0xff]
    %v136 = vld [vmem:[#allocation2 + $0x1c8] sm:$0xff]
    %v137 = vld [vmem:[#allocation2 + $0x1d0] sm:$0xff]
    %v138 = vld [vmem:[#allocation2 + $0x1d8] sm:$0xff]
    %v139 = vld [vmem:[#allocation2 + $0x1e0] sm:$0xff]
    %v140 = vld [vmem:[#allocation2 + $0x1e8] sm:$0xff]
    %v141 = vld [vmem:[#allocation2 + $0x1f0] sm:$0xff]
    %v142 = vld [vmem:[#allocation2 + $0x1f8] sm:$0xff]
    %v143 = vld [vmem:[%s2] sm:$0xf]
    %v144 = vld [vmem:[#allocation5] sm:$0xff]
    %v145 = vld [vmem:[#allocation5 + $0x8] sm:$0xff]
    %v146 = vld [vmem:[#allocation5 + $0x10] sm:$0xff]
    %v147 = vld [vmem:[#allocation5 + $0x18] sm:$0xff]
    %v148 = vld [vmem:[#allocation5 + $0x20] sm:$0xff]
    %v149 = vld [vmem:[#allocation5 + $0x28] sm:$0xff]
    %v150 = vld [vmem:[#allocation5 + $0x30] sm:$0xff]
    %v151 = vld [vmem:[#allocation5 + $0x38] sm:$0xff]
    %v152 = vld [vmem:[#allocation5 + $0x40] sm:$0xff]
    %v153 = vld [vmem:[#allocation5 + $0x48] sm:$0xff]
    %v154 = vld [vmem:[#allocation5 + $0x50] sm:$0xff]
    %v155 = vld [vmem:[#allocation5 + $0x58] sm:$0xff]
    %v156 = vld [vmem:[#allocation5 + $0x60] sm:$0xff]
    %v157 = vld [vmem:[#allocation5 + $0x68] sm:$0xff]
    %v158 = vld [vmem:[#allocation5 + $0x70] sm:$0xff]
    %v159 = vld [vmem:[#allocation5 + $0x78] sm:$0xff]
    %v160 = vld [vmem:[#allocation5 + $0x80] sm:$0xff]
    %v161 = vld [vmem:[#allocation5 + $0x88] sm:$0xff]
    %v162 = vld [vmem:[#allocation5 + $0x90] sm:$0xff]
    %v163 = vld [vmem:[#allocation5 + $0x98] sm:$0xff]
    %v164 = vld [vmem:[#allocation5 + $0xa0] sm:$0xff]
    %v165 = vld [vmem:[#allocation5 + $0xa8] sm:$0xff]
    %v166 = vld [vmem:[#allocation5 + $0xb0] sm:$0xff]
    %v167 = vld [vmem:[#allocation5 + $0xb8] sm:$0xff]
    %v168 = vld [vmem:[#allocation5 + $0xc0] sm:$0xff]
    %v169 = vld [vmem:[#allocation5 + $0xc8] sm:$0xff]
    %v170 = vld [vmem:[#allocation5 + $0xd0] sm:$0xff]
    %v171 = vld [vmem:[#allocation5 + $0xd8] sm:$0xff]
    %v172 = vld [vmem:[#allocation5 + $0xe0] sm:$0xff]
    %v173 = vld [vmem:[#allocation5 + $0xe8] sm:$0xff]
    %v174 = vld [vmem:[#allocation5 + $0xf0] sm:$0xff]
    %v175 = vld [vmem:[#allocation5 + $0xf8] sm:$0xff]
    %v176 = vld [vmem:[#allocation5 + $0x100] sm:$0xff]
    %v177 = vld [vmem:[#allocation5 + $0x108] sm:$0xff]
    %v178 = vld [vmem:[#allocation5 + $0x110] sm:$0xff]
    %v179 = vld [vmem:[#allocation5 + $0x118] sm:$0xff]
    %v180 = vld [vmem:[#allocation5 + $0x120] sm:$0xff]
    %v181 = vld [vmem:[#allocation5 + $0x128] sm:$0xff]
    %v182 = vld [vmem:[#allocation5 + $0x130] sm:$0xff]
    %v183 = vld [vmem:[#allocation5 + $0x138] sm:$0xff]
    %v184 = vld [vmem:[#allocation5 + $0x140] sm:$0xff]
    %v185 = vld [vmem:[#allocation5 + $0x148] sm:$0xff]
    %v186 = vld [vmem:[#allocation5 + $0x150] sm:$0xff]
    %v187 = vld [vmem:[#allocation5 + $0x158] sm:$0xff]
    %v188 = vld [vmem:[#allocation5 + $0x160] sm:$0xff]
    %v189 = vld [vmem:[#allocation5 + $0x168] sm:$0xff]
    %v190 = vld [vmem:[#allocation5 + $0x170] sm:$0xff]
    %v191 = vld [vmem:[#allocation5 + $0x178] sm:$0xff]
    %v192 = vld [vmem:[#allocation5 + $0x180] sm:$0xff]
    %v193 = vld [vmem:[#allocation5 + $0x188] sm:$0xff]
    %v194 = vld [vmem:[#allocation5 + $0x190] sm:$0xff]
    %v195 = vld [vmem:[#allocation5 + $0x198] sm:$0xff]
    %v196 = vld [vmem:[#allocation5 + $0x1a0] sm:$0xff]
    %v197 = vld [vmem:[#allocation5 + $0x1a8] sm:$0xff]
    %v198 = vld [vmem:[#allocation5 + $0x1b0] sm:$0xff]
    %v199 = vld [vmem:[#allocation5 + $0x1b8] sm:$0xff]
    %v200 = vld [vmem:[#allocation5 + $0x1c0] sm:$0xff]
    %v201 = vld [vmem:[#allocation5 + $0x1c8] sm:$0xff]
    %v202 = vld [vmem:[#allocation5 + $0x1d0] sm:$0xff]
    %v203 = vld [vmem:[#allocation5 + $0x1d8] sm:$0xff]
    %v204 = vld [vmem:[#allocation5 + $0x1e0] sm:$0xff]
    %v205 = vld [vmem:[#allocation5 + $0x1e8] sm:$0xff]
    %v206 = vld [vmem:[#allocation5 + $0x1f0] sm:$0xff]
    %v207 = vld [vmem:[#allocation5 + $0x1f8] sm:$0xff]
    %v208 = vld [vmem:[#allocation7] sm:$0xff]
    %v209 = vld [vmem:[#allocation7 + $0x8] sm:$0xff]
    %v210 = vld [vmem:[#allocation7 + $0x10] sm:$0xff]
    %v211 = vld [vmem:[#allocation7 + $0x18] sm:$0xff]
    %v212 = vld [vmem:[#allocation7 + $0x20] sm:$0xff]
    %v213 = vld [vmem:[#allocation7 + $0x28] sm:$0xff]
    %v214 = vld [vmem:[#allocation7 + $0x30] sm:$0xff]
    %v215 = vld [vmem:[#allocation7 + $0x38] sm:$0xff]
    %v216 = vld [vmem:[#allocation7 + $0x40] sm:$0xff]
    %v217 = vld [vmem:[#allocation7 + $0x48] sm:$0xff]
    %v218 = vld [vmem:[#allocation7 + $0x50] sm:$0xff]
    %v219 = vld [vmem:[#allocation7 + $0x58] sm:$0xff]
    %v220 = vld [vmem:[#allocation7 + $0x60] sm:$0xff]
    %v221 = vld [vmem:[#allocation7 + $0x68] sm:$0xff]
    %v222 = vld [vmem:[#allocation7 + $0x70] sm:$0xff]
    %v223 = vld [vmem:[#allocation7 + $0x78] sm:$0xff]
    %v224 = vld [vmem:[%s5] sm:$0x1]
    %v225 = vlaneseq
    %v226 = vand.u32 %v225, 127
    %227 = vset.pattern.permute.xlu0 0
    %228 = vperm.xlu0 %227, %v71
    %v229 = vpop.permute.xlu0 %228
    %230 = vset.pattern.permute.xlu0 0
    %231 = vperm.xlu0 %230, %v72
    %v232 = vpop.permute.xlu0 %231
    %233 = vset.pattern.permute.xlu0 0
    %234 = vperm.xlu0 %233, %v73
    %v235 = vpop.permute.xlu0 %234
    %236 = vset.pattern.permute.xlu0 0
    %237 = vperm.xlu0 %236, %v74
    %v238 = vpop.permute.xlu0 %237
    %239 = vset.pattern.permute.xlu0 0
    %240 = vperm.xlu0 %239, %v75
    %v241 = vpop.permute.xlu0 %240
    %242 = vset.pattern.permute.xlu0 0
    %243 = vperm.xlu0 %242, %v76
    %v244 = vpop.permute.xlu0 %243
    %245 = vset.pattern.permute.xlu0 0
    %246 = vperm.xlu0 %245, %v77
    %v247 = vpop.permute.xlu0 %246
    %248 = vset.pattern.permute.xlu0 0
    %249 = vperm.xlu0 %248, %v78
    %v250 = vpop.permute.xlu0 %249
    %vm251 = vcmp.eq.s32.totalorder %v226, %v229
    %vm252 = vcmp.eq.s32.totalorder %v226, %v232
    %vm253 = vcmp.eq.s32.totalorder %v226, %v235
    %vm254 = vcmp.eq.s32.totalorder %v226, %v238
    %vm255 = vcmp.eq.s32.totalorder %v226, %v241
    %vm256 = vcmp.eq.s32.totalorder %v226, %v244
    %vm257 = vcmp.eq.s32.totalorder %v226, %v247
    %vm258 = vcmp.eq.s32.totalorder %v226, %v250
    %v259 = vsel %vm251, 1, 0
    %v260 = vsel %vm252, 1, 0
    %v261 = vsel %vm253, 1, 0
    %v262 = vsel %vm254, 1, 0
    %v263 = vsel %vm255, 1, 0
    %v264 = vsel %vm256, 1, 0
    %v265 = vsel %vm257, 1, 0
    %v266 = vsel %vm258, 1, 0
    %v267 = vcvt.s32.f32 %v259
    %v268 = vcvt.s32.f32 %v260
    %v269 = vcvt.s32.f32 %v261
    %v270 = vcvt.s32.f32 %v262
    %v271 = vcvt.s32.f32 %v263
    %v272 = vcvt.s32.f32 %v264
    %v273 = vcvt.s32.f32 %v265
    %v274 = vcvt.s32.f32 %v266
    %v276 = vperm.slane %v143, 0
    %v277 = vperm.slane %v143, 1
    %v278 = vperm.slane %v143, 2
    %v279 = vperm.slane %v143, 3
    %284 = vmatpush.msra.mxu0 %v139
    %285 = vmatpush.msra.mxu0 %v135
    %286 = vmatpush.msra.mxu0 %v131
    %287 = vmatpush.msra.mxu0 %v127
    %288 = vmatpush.msra.mxu0 %v123
    %289 = vmatpush.msra.mxu0 %v119
    %290 = vmatpush.msra.mxu0 %v115
    %291 = vmatpush.msra.mxu0 %v111
    %292 = vmatpush.msra.mxu0 %v107
    %293 = vmatpush.msra.mxu0 %v103
    %294 = vmatpush.msra.mxu0 %v99
    %295 = vmatpush.msra.mxu0 %v95
    %296 = vmatpush.msra.mxu0 %v91
    %297 = vmatpush.msra.mxu0 %v87
    %298 = vmatpush.msra.mxu0 %v83
    %299 = vmatpush.msra.mxu0 %v79
    %300 = vmatmul.f32.gmra.mxu0 %v267
    %v301 = vpop.f32.mrf.mxu0
    %v302 = vadd.f32 %v276, %v301
    %303 = vmatmul.f32.gmra.mxu0 %v268
    %v304 = vpop.f32.mrf.mxu0
    %v305 = vadd.f32 %v276, %v304
    %306 = vmatmul.f32.gmra.mxu0 %v269
    %v307 = vpop.f32.mrf.mxu0
    %v308 = vadd.f32 %v276, %v307
    %309 = vmatmul.f32.gmra.mxu0 %v270
    %v310 = vpop.f32.mrf.mxu0
    %v311 = vadd.f32 %v276, %v310
    %312 = vmatmul.f32.gmra.mxu0 %v271
    %v313 = vpop.f32.mrf.mxu0
    %v314 = vadd.f32 %v276, %v313
    %315 = vmatmul.f32.gmra.mxu0 %v272
    %v316 = vpop.f32.mrf.mxu0
    %v317 = vadd.f32 %v276, %v316
    %318 = vmatmul.f32.gmra.mxu0 %v273
    %v319 = vpop.f32.mrf.mxu0
    %v320 = vadd.f32 %v276, %v319
    %321 = vmatmul.f32.gmra.mxu0 %v274
    %v322 = vpop.f32.mrf.mxu0
    %v323 = vadd.f32 %v276, %v322
    %324 = vdwg.mxu0
    %325 = vmatpush.msra.mxu0 %v140
    %326 = vmatpush.msra.mxu0 %v136
    %327 = vmatpush.msra.mxu0 %v132
    %328 = vmatpush.msra.mxu0 %v128
    %329 = vmatpush.msra.mxu0 %v124
    %330 = vmatpush.msra.mxu0 %v120
    %331 = vmatpush.msra.mxu0 %v116
    %332 = vmatpush.msra.mxu0 %v112
    %333 = vmatpush.msra.mxu0 %v108
    %334 = vmatpush.msra.mxu0 %v104
    %335 = vmatpush.msra.mxu0 %v100
    %336 = vmatpush.msra.mxu0 %v96
    %337 = vmatpush.msra.mxu0 %v92
    %338 = vmatpush.msra.mxu0 %v88
    %339 = vmatpush.msra.mxu0 %v84
    %340 = vmatpush.msra.mxu0 %v80
    %341 = vmatmul.f32.gmra.mxu0 %v267
    %v342 = vpop.f32.mrf.mxu0
    %v343 = vadd.f32 %v277, %v342
    %344 = vmatmul.f32.gmra.mxu0 %v268
    %v345 = vpop.f32.mrf.mxu0
    %v346 = vadd.f32 %v277, %v345
    %347 = vmatmul.f32.gmra.mxu0 %v269
    %v348 = vpop.f32.mrf.mxu0
    %v349 = vadd.f32 %v277, %v348
    %350 = vmatmul.f32.gmra.mxu0 %v270
    %v351 = vpop.f32.mrf.mxu0
    %v352 = vadd.f32 %v277, %v351
    %353 = vmatmul.f32.gmra.mxu0 %v271
    %v354 = vpop.f32.mrf.mxu0
    %v355 = vadd.f32 %v277, %v354
    %356 = vmatmul.f32.gmra.mxu0 %v272
    %v357 = vpop.f32.mrf.mxu0
    %v358 = vadd.f32 %v277, %v357
    %359 = vmatmul.f32.gmra.mxu0 %v273
    %v360 = vpop.f32.mrf.mxu0
    %v361 = vadd.f32 %v277, %v360
    %362 = vmatmul.f32.gmra.mxu0 %v274
    %v363 = vpop.f32.mrf.mxu0
    %v364 = vadd.f32 %v277, %v363
    %365 = vdwg.mxu0
    %366 = vmatpush.msra.mxu0 %v141
    %367 = vmatpush.msra.mxu0 %v137
    %368 = vmatpush.msra.mxu0 %v133
    %369 = vmatpush.msra.mxu0 %v129
    %370 = vmatpush.msra.mxu0 %v125
    %371 = vmatpush.msra.mxu0 %v121
    %372 = vmatpush.msra.mxu0 %v117
    %373 = vmatpush.msra.mxu0 %v113
    %374 = vmatpush.msra.mxu0 %v109
    %375 = vmatpush.msra.mxu0 %v105
    %376 = vmatpush.msra.mxu0 %v101
    %377 = vmatpush.msra.mxu0 %v97
    %378 = vmatpush.msra.mxu0 %v93
    %379 = vmatpush.msra.mxu0 %v89
    %380 = vmatpush.msra.mxu0 %v85
    %381 = vmatpush.msra.mxu0 %v81
    %382 = vmatmul.f32.gmra.mxu0 %v267
    %v383 = vpop.f32.mrf.mxu0
    %v384 = vadd.f32 %v278, %v383
    %385 = vmatmul.f32.gmra.mxu0 %v268
    %v386 = vpop.f32.mrf.mxu0
    %v387 = vadd.f32 %v278, %v386
    %388 = vmatmul.f32.gmra.mxu0 %v269
    %v389 = vpop.f32.mrf.mxu0
    %v390 = vadd.f32 %v278, %v389
    %391 = vmatmul.f32.gmra.mxu0 %v270
    %v392 = vpop.f32.mrf.mxu0
    %v393 = vadd.f32 %v278, %v392
    %394 = vmatmul.f32.gmra.mxu0 %v271
    %v395 = vpop.f32.mrf.mxu0
    %v396 = vadd.f32 %v278, %v395
    %397 = vmatmul.f32.gmra.mxu0 %v272
    %v398 = vpop.f32.mrf.mxu0
    %v399 = vadd.f32 %v278, %v398
    %400 = vmatmul.f32.gmra.mxu0 %v273
    %v401 = vpop.f32.mrf.mxu0
    %v402 = vadd.f32 %v278, %v401
    %403 = vmatmul.f32.gmra.mxu0 %v274
    %v404 = vpop.f32.mrf.mxu0
    %v405 = vadd.f32 %v278, %v404
    %406 = vdwg.mxu0
    %407 = vmatpush.msra.mxu0 %v142
    %408 = vmatpush.msra.mxu0 %v138
    %409 = vmatpush.msra.mxu0 %v134
    %410 = vmatpush.msra.mxu0 %v130
    %411 = vmatpush.msra.mxu0 %v126
    %412 = vmatpush.msra.mxu0 %v122
    %413 = vmatpush.msra.mxu0 %v118
    %414 = vmatpush.msra.mxu0 %v114
    %415 = vmatpush.msra.mxu0 %v110
    %416 = vmatpush.msra.mxu0 %v106
    %417 = vmatpush.msra.mxu0 %v102
    %418 = vmatpush.msra.mxu0 %v98
    %419 = vmatpush.msra.mxu0 %v94
    %420 = vmatpush.msra.mxu0 %v90
    %421 = vmatpush.msra.mxu0 %v86
    %422 = vmatpush.msra.mxu0 %v82
    %423 = vmatmul.f32.gmra.mxu0 %v267
    %v424 = vpop.f32.mrf.mxu0
    %v425 = vadd.f32 %v279, %v424
    %426 = vmatmul.f32.gmra.mxu0 %v268
    %v427 = vpop.f32.mrf.mxu0
    %v428 = vadd.f32 %v279, %v427
    %429 = vmatmul.f32.gmra.mxu0 %v269
    %v430 = vpop.f32.mrf.mxu0
    %v431 = vadd.f32 %v279, %v430
    %432 = vmatmul.f32.gmra.mxu0 %v270
    %v433 = vpop.f32.mrf.mxu0
    %v434 = vadd.f32 %v279, %v433
    %435 = vmatmul.f32.gmra.mxu0 %v271
    %v436 = vpop.f32.mrf.mxu0
    %v437 = vadd.f32 %v279, %v436
    %438 = vmatmul.f32.gmra.mxu0 %v272
    %v439 = vpop.f32.mrf.mxu0
    %v440 = vadd.f32 %v279, %v439
    %441 = vmatmul.f32.gmra.mxu0 %v273
    %v442 = vpop.f32.mrf.mxu0
    %v443 = vadd.f32 %v279, %v442
    %444 = vmatmul.f32.gmra.mxu0 %v274
    %v445 = vpop.f32.mrf.mxu0
    %v446 = vadd.f32 %v279, %v445
    %447 = vdwg.mxu0
    %448 = vmatpush.msra.mxu0 %v204
    %449 = vmatpush.msra.mxu0 %v200
    %450 = vmatpush.msra.mxu0 %v196
    %451 = vmatpush.msra.mxu0 %v192
    %452 = vmatpush.msra.mxu0 %v188
    %453 = vmatpush.msra.mxu0 %v184
    %454 = vmatpush.msra.mxu0 %v180
    %455 = vmatpush.msra.mxu0 %v176
    %456 = vmatpush.msra.mxu0 %v172
    %457 = vmatpush.msra.mxu0 %v168
    %458 = vmatpush.msra.mxu0 %v164
    %459 = vmatpush.msra.mxu0 %v160
    %460 = vmatpush.msra.mxu0 %v156
    %461 = vmatpush.msra.mxu0 %v152
    %462 = vmatpush.msra.mxu0 %v148
    %463 = vmatpush.msra.mxu0 %v144
    %464 = vmatmul.f32.gmra.mxu0 0.0
    %v465 = vpop.f32.mrf.mxu0
    %v466 = vadd.f32 0.0, %v465
    %467 = vdwg.mxu0
    %468 = vmatpush.msra.mxu0 %v205
    %469 = vmatpush.msra.mxu0 %v201
    %470 = vmatpush.msra.mxu0 %v197
    %471 = vmatpush.msra.mxu0 %v193
    %472 = vmatpush.msra.mxu0 %v189
    %473 = vmatpush.msra.mxu0 %v185
    %474 = vmatpush.msra.mxu0 %v181
    %475 = vmatpush.msra.mxu0 %v177
    %476 = vmatpush.msra.mxu0 %v173
    %477 = vmatpush.msra.mxu0 %v169
    %478 = vmatpush.msra.mxu0 %v165
    %479 = vmatpush.msra.mxu0 %v161
    %480 = vmatpush.msra.mxu0 %v157
    %481 = vmatpush.msra.mxu0 %v153
    %482 = vmatpush.msra.mxu0 %v149
    %483 = vmatpush.msra.mxu0 %v145
    %484 = vmatmul.f32.gmra.mxu0 0.0
    %v485 = vpop.f32.mrf.mxu0
    %v486 = vadd.f32 0.0, %v485
    %487 = vdwg.mxu0
    %488 = vmatpush.msra.mxu0 %v206
    %489 = vmatpush.msra.mxu0 %v202
    %490 = vmatpush.msra.mxu0 %v198
    %491 = vmatpush.msra.mxu0 %v194
    %492 = vmatpush.msra.mxu0 %v190
    %493 = vmatpush.msra.mxu0 %v186
    %494 = vmatpush.msra.mxu0 %v182
    %495 = vmatpush.msra.mxu0 %v178
    %496 = vmatpush.msra.mxu0 %v174
    %497 = vmatpush.msra.mxu0 %v170
    %498 = vmatpush.msra.mxu0 %v166
    %499 = vmatpush.msra.mxu0 %v162
    %500 = vmatpush.msra.mxu0 %v158
    %501 = vmatpush.msra.mxu0 %v154
    %502 = vmatpush.msra.mxu0 %v150
    %503 = vmatpush.msra.mxu0 %v146
    %504 = vmatmul.f32.gmra.mxu0 0.0
    %v505 = vpop.f32.mrf.mxu0
    %v506 = vadd.f32 0.0, %v505
    %507 = vdwg.mxu0
    %508 = vmatpush.msra.mxu0 %v207
    %509 = vmatpush.msra.mxu0 %v203
    %510 = vmatpush.msra.mxu0 %v199
    %511 = vmatpush.msra.mxu0 %v195
    %512 = vmatpush.msra.mxu0 %v191
    %513 = vmatpush.msra.mxu0 %v187
    %514 = vmatpush.msra.mxu0 %v183
    %515 = vmatpush.msra.mxu0 %v179
    %516 = vmatpush.msra.mxu0 %v175
    %517 = vmatpush.msra.mxu0 %v171
    %518 = vmatpush.msra.mxu0 %v167
    %519 = vmatpush.msra.mxu0 %v163
    %520 = vmatpush.msra.mxu0 %v159
    %521 = vmatpush.msra.mxu0 %v155
    %522 = vmatpush.msra.mxu0 %v151
    %523 = vmatpush.msra.mxu0 %v147
    %524 = vmatmul.f32.gmra.mxu0 0.0
    %v525 = vpop.f32.mrf.mxu0
    %v526 = vadd.f32 0.0, %v525
    %527 = vdwg.mxu0
    %v528 = vadd.f32 %v302, %v466
    %v529 = vadd.f32 %v343, %v486
    %v530 = vadd.f32 %v384, %v506
    %v531 = vadd.f32 %v425, %v526
    %v532 = vmul.f32 %v528, 0.5
    %v533 = vtanh.pop %v532
    %v534 = vadd.f32 %v533, 1.0
    %v535 = vmul.f32 %v534, 0.5
    %v536 = vmul.f32 %v529, 0.5
    %v537 = vtanh.pop %v536
    %v538 = vadd.f32 %v537, 1.0
    %v539 = vmul.f32 %v538, 0.5
    %v540 = vtanh.pop %v530
    %v541 = vmul.f32 %v531, 0.5
    %v542 = vtanh.pop %v541
    %v543 = vadd.f32 %v542, 1.0
    %v544 = vmul.f32 %v543, 0.5
    %v545 = vmul.f32 %v539, 0.0
    %v546 = vmul.f32 %v535, %v540
    %v547 = vadd.f32 %v545, %v546
    %v548 = vtanh.pop %v547
    %v549 = vmul.f32 %v544, %v548
    %550 = vmatpush.msra.mxu0 %v204
    %551 = vmatpush.msra.mxu0 %v200
    %552 = vmatpush.msra.mxu0 %v196
    %553 = vmatpush.msra.mxu0 %v192
    %554 = vmatpush.msra.mxu0 %v188
    %555 = vmatpush.msra.mxu0 %v184
    %556 = vmatpush.msra.mxu0 %v180
    %557 = vmatpush.msra.mxu0 %v176
    %558 = vmatpush.msra.mxu0 %v172
    %559 = vmatpush.msra.mxu0 %v168
    %560 = vmatpush.msra.mxu0 %v164
    %561 = vmatpush.msra.mxu0 %v160
    %562 = vmatpush.msra.mxu0 %v156
    %563 = vmatpush.msra.mxu0 %v152
    %564 = vmatpush.msra.mxu0 %v148
    %565 = vmatpush.msra.mxu0 %v144
    %566 = vmatmul.f32.gmra.mxu0 %v549
    %v567 = vpop.f32.mrf.mxu0
    %v568 = vadd.f32 0.0, %v567
    %569 = vdwg.mxu0
    %570 = vmatpush.msra.mxu0 %v205
    %571 = vmatpush.msra.mxu0 %v201
    %572 = vmatpush.msra.mxu0 %v197
    %573 = vmatpush.msra.mxu0 %v193
    %574 = vmatpush.msra.mxu0 %v189
    %575 = vmatpush.msra.mxu0 %v185
    %576 = vmatpush.msra.mxu0 %v181
    %577 = vmatpush.msra.mxu0 %v177
    %578 = vmatpush.msra.mxu0 %v173
    %579 = vmatpush.msra.mxu0 %v169
    %580 = vmatpush.msra.mxu0 %v165
    %581 = vmatpush.msra.mxu0 %v161
    %582 = vmatpush.msra.mxu0 %v157
    %583 = vmatpush.msra.mxu0 %v153
    %584 = vmatpush.msra.mxu0 %v149
    %585 = vmatpush.msra.mxu0 %v145
    %586 = vmatmul.f32.gmra.mxu0 %v549
    %v587 = vpop.f32.mrf.mxu0
    %v588 = vadd.f32 0.0, %v587
    %589 = vdwg.mxu0
    %590 = vmatpush.msra.mxu0 %v206
    %591 = vmatpush.msra.mxu0 %v202
    %592 = vmatpush.msra.mxu0 %v198
    %593 = vmatpush.msra.mxu0 %v194
    %594 = vmatpush.msra.mxu0 %v190
    %595 = vmatpush.msra.mxu0 %v186
    %596 = vmatpush.msra.mxu0 %v182
    %597 = vmatpush.msra.mxu0 %v178
    %598 = vmatpush.msra.mxu0 %v174
    %599 = vmatpush.msra.mxu0 %v170
    %600 = vmatpush.msra.mxu0 %v166
    %601 = vmatpush.msra.mxu0 %v162
    %602 = vmatpush.msra.mxu0 %v158
    %603 = vmatpush.msra.mxu0 %v154
    %604 = vmatpush.msra.mxu0 %v150
    %605 = vmatpush.msra.mxu0 %v146
    %606 = vmatmul.f32.gmra.mxu0 %v549
    %v607 = vpop.f32.mrf.mxu0
    %v608 = vadd.f32 0.0, %v607
    %609 = vdwg.mxu0
    %610 = vmatpush.msra.mxu0 %v207
    %611 = vmatpush.msra.mxu0 %v203
    %612 = vmatpush.msra.mxu0 %v199
    %613 = vmatpush.msra.mxu0 %v195
    %614 = vmatpush.msra.mxu0 %v191
    %615 = vmatpush.msra.mxu0 %v187
    %616 = vmatpush.msra.mxu0 %v183
    %617 = vmatpush.msra.mxu0 %v179
    %618 = vmatpush.msra.mxu0 %v175
    %619 = vmatpush.msra.mxu0 %v171
    %620 = vmatpush.msra.mxu0 %v167
    %621 = vmatpush.msra.mxu0 %v163
    %622 = vmatpush.msra.mxu0 %v159
    %623 = vmatpush.msra.mxu0 %v155
    %624 = vmatpush.msra.mxu0 %v151
    %625 = vmatpush.msra.mxu0 %v147
    %626 = vmatmul.f32.gmra.mxu0 %v549
    %v627 = vpop.f32.mrf.mxu0
    %v628 = vadd.f32 0.0, %v627
    %629 = vdwg.mxu0
    %v630 = vadd.f32 %v305, %v568
    %v631 = vadd.f32 %v346, %v588
    %v632 = vadd.f32 %v387, %v608
    %v633 = vadd.f32 %v428, %v628
    %v634 = vmul.f32 %v630, 0.5
    %v635 = vtanh.pop %v634
    %v636 = vadd.f32 %v635, 1.0
    %v637 = vmul.f32 %v636, 0.5
    %v638 = vmul.f32 %v631, 0.5
    %v639 = vtanh.pop %v638
    %v640 = vadd.f32 %v639, 1.0
    %v641 = vmul.f32 %v640, 0.5
    %v642 = vtanh.pop %v632
    %v643 = vmul.f32 %v633, 0.5
    %v644 = vtanh.pop %v643
    %v645 = vadd.f32 %v644, 1.0
    %v646 = vmul.f32 %v645, 0.5
    %v647 = vmul.f32 %v641, %v547
    %v648 = vmul.f32 %v637, %v642
    %v649 = vadd.f32 %v647, %v648
    %v650 = vtanh.pop %v649
    %v651 = vmul.f32 %v646, %v650
    %652 = vmatpush.msra.mxu0 %v204
    %653 = vmatpush.msra.mxu0 %v200
    %654 = vmatpush.msra.mxu0 %v196
    %655 = vmatpush.msra.mxu0 %v192
    %656 = vmatpush.msra.mxu0 %v188
    %657 = vmatpush.msra.mxu0 %v184
    %658 = vmatpush.msra.mxu0 %v180
    %659 = vmatpush.msra.mxu0 %v176
    %660 = vmatpush.msra.mxu0 %v172
    %661 = vmatpush.msra.mxu0 %v168
    %662 = vmatpush.msra.mxu0 %v164
    %663 = vmatpush.msra.mxu0 %v160
    %664 = vmatpush.msra.mxu0 %v156
    %665 = vmatpush.msra.mxu0 %v152
    %666 = vmatpush.msra.mxu0 %v148
    %667 = vmatpush.msra.mxu0 %v144
    %668 = vmatmul.f32.gmra.mxu0 %v651
    %v669 = vpop.f32.mrf.mxu0
    %v670 = vadd.f32 0.0, %v669
    %671 = vdwg.mxu0
    %672 = vmatpush.msra.mxu0 %v205
    %673 = vmatpush.msra.mxu0 %v201
    %674 = vmatpush.msra.mxu0 %v197
    %675 = vmatpush.msra.mxu0 %v193
    %676 = vmatpush.msra.mxu0 %v189
    %677 = vmatpush.msra.mxu0 %v185
    %678 = vmatpush.msra.mxu0 %v181
    %679 = vmatpush.msra.mxu0 %v177
    %680 = vmatpush.msra.mxu0 %v173
    %681 = vmatpush.msra.mxu0 %v169
    %682 = vmatpush.msra.mxu0 %v165
    %683 = vmatpush.msra.mxu0 %v161
    %684 = vmatpush.msra.mxu0 %v157
    %685 = vmatpush.msra.mxu0 %v153
    %686 = vmatpush.msra.mxu0 %v149
    %687 = vmatpush.msra.mxu0 %v145
    %688 = vmatmul.f32.gmra.mxu0 %v651
    %v689 = vpop.f32.mrf.mxu0
    %v690 = vadd.f32 0.0, %v689
    %691 = vdwg.mxu0
    %692 = vmatpush.msra.mxu0 %v206
    %693 = vmatpush.msra.mxu0 %v202
    %694 = vmatpush.msra.mxu0 %v198
    %695 = vmatpush.msra.mxu0 %v194
    %696 = vmatpush.msra.mxu0 %v190
    %697 = vmatpush.msra.mxu0 %v186
    %698 = vmatpush.msra.mxu0 %v182
    %699 = vmatpush.msra.mxu0 %v178
    %700 = vmatpush.msra.mxu0 %v174
    %701 = vmatpush.msra.mxu0 %v170
    %702 = vmatpush.msra.mxu0 %v166
    %703 = vmatpush.msra.mxu0 %v162
    %704 = vmatpush.msra.mxu0 %v158
    %705 = vmatpush.msra.mxu0 %v154
    %706 = vmatpush.msra.mxu0 %v150
    %707 = vmatpush.msra.mxu0 %v146
    %708 = vmatmul.f32.gmra.mxu0 %v651
    %v709 = vpop.f32.mrf.mxu0
    %v710 = vadd.f32 0.0, %v709
    %711 = vdwg.mxu0
    %712 = vmatpush.msra.mxu0 %v207
    %713 = vmatpush.msra.mxu0 %v203
    %714 = vmatpush.msra.mxu0 %v199
    %715 = vmatpush.msra.mxu0 %v195
    %716 = vmatpush.msra.mxu0 %v191
    %717 = vmatpush.msra.mxu0 %v187
    %718 = vmatpush.msra.mxu0 %v183
    %719 = vmatpush.msra.mxu0 %v179
    %720 = vmatpush.msra.mxu0 %v175
    %721 = vmatpush.msra.mxu0 %v171
    %722 = vmatpush.msra.mxu0 %v167
    %723 = vmatpush.msra.mxu0 %v163
    %724 = vmatpush.msra.mxu0 %v159
    %725 = vmatpush.msra.mxu0 %v155
    %726 = vmatpush.msra.mxu0 %v151
    %727 = vmatpush.msra.mxu0 %v147
    %728 = vmatmul.f32.gmra.mxu0 %v651
    %v729 = vpop.f32.mrf.mxu0
    %v730 = vadd.f32 0.0, %v729
    %731 = vdwg.mxu0
    %v732 = vadd.f32 %v308, %v670
    %v733 = vadd.f32 %v349, %v690
    %v734 = vadd.f32 %v390, %v710
    %v735 = vadd.f32 %v431, %v730
    %v736 = vmul.f32 %v732, 0.5
    %v737 = vtanh.pop %v736
    %v738 = vadd.f32 %v737, 1.0
    %v739 = vmul.f32 %v738, 0.5
    %v740 = vmul.f32 %v733, 0.5
    %v741 = vtanh.pop %v740
    %v742 = vadd.f32 %v741, 1.0
    %v743 = vmul.f32 %v742, 0.5
    %v744 = vtanh.pop %v734
    %v745 = vmul.f32 %v735, 0.5
    %v746 = vtanh.pop %v745
    %v747 = vadd.f32 %v746, 1.0
    %v748 = vmul.f32 %v747, 0.5
    %v749 = vmul.f32 %v743, %v649
    %v750 = vmul.f32 %v739, %v744
    %v751 = vadd.f32 %v749, %v750
    %v752 = vtanh.pop %v751
    %v753 = vmul.f32 %v748, %v752
    %754 = vmatpush.msra.mxu0 %v204
    %755 = vmatpush.msra.mxu0 %v200
    %756 = vmatpush.msra.mxu0 %v196
    %757 = vmatpush.msra.mxu0 %v192
    %758 = vmatpush.msra.mxu0 %v188
    %759 = vmatpush.msra.mxu0 %v184
    %760 = vmatpush.msra.mxu0 %v180
    %761 = vmatpush.msra.mxu0 %v176
    %762 = vmatpush.msra.mxu0 %v172
    %763 = vmatpush.msra.mxu0 %v168
    %764 = vmatpush.msra.mxu0 %v164
    %765 = vmatpush.msra.mxu0 %v160
    %766 = vmatpush.msra.mxu0 %v156
    %767 = vmatpush.msra.mxu0 %v152
    %768 = vmatpush.msra.mxu0 %v148
    %769 = vmatpush.msra.mxu0 %v144
    %770 = vmatmul.f32.gmra.mxu0 %v753
    %v771 = vpop.f32.mrf.mxu0
    %v772 = vadd.f32 0.0, %v771
    %773 = vdwg.mxu0
    %774 = vmatpush.msra.mxu0 %v205
    %775 = vmatpush.msra.mxu0 %v201
    %776 = vmatpush.msra.mxu0 %v197
    %777 = vmatpush.msra.mxu0 %v193
    %778 = vmatpush.msra.mxu0 %v189
    %779 = vmatpush.msra.mxu0 %v185
    %780 = vmatpush.msra.mxu0 %v181
    %781 = vmatpush.msra.mxu0 %v177
    %782 = vmatpush.msra.mxu0 %v173
    %783 = vmatpush.msra.mxu0 %v169
    %784 = vmatpush.msra.mxu0 %v165
    %785 = vmatpush.msra.mxu0 %v161
    %786 = vmatpush.msra.mxu0 %v157
    %787 = vmatpush.msra.mxu0 %v153
    %788 = vmatpush.msra.mxu0 %v149
    %789 = vmatpush.msra.mxu0 %v145
    %790 = vmatmul.f32.gmra.mxu0 %v753
    %v791 = vpop.f32.mrf.mxu0
    %v792 = vadd.f32 0.0, %v791
    %793 = vdwg.mxu0
    %794 = vmatpush.msra.mxu0 %v206
    %795 = vmatpush.msra.mxu0 %v202
    %796 = vmatpush.msra.mxu0 %v198
    %797 = vmatpush.msra.mxu0 %v194
    %798 = vmatpush.msra.mxu0 %v190
    %799 = vmatpush.msra.mxu0 %v186
    %800 = vmatpush.msra.mxu0 %v182
    %801 = vmatpush.msra.mxu0 %v178
    %802 = vmatpush.msra.mxu0 %v174
    %803 = vmatpush.msra.mxu0 %v170
    %804 = vmatpush.msra.mxu0 %v166
    %805 = vmatpush.msra.mxu0 %v162
    %806 = vmatpush.msra.mxu0 %v158
    %807 = vmatpush.msra.mxu0 %v154
    %808 = vmatpush.msra.mxu0 %v150
    %809 = vmatpush.msra.mxu0 %v146
    %810 = vmatmul.f32.gmra.mxu0 %v753
    %v811 = vpop.f32.mrf.mxu0
    %v812 = vadd.f32 0.0, %v811
    %813 = vdwg.mxu0
    %814 = vmatpush.msra.mxu0 %v207
    %815 = vmatpush.msra.mxu0 %v203
    %816 = vmatpush.msra.mxu0 %v199
    %817 = vmatpush.msra.mxu0 %v195
    %818 = vmatpush.msra.mxu0 %v191
    %819 = vmatpush.msra.mxu0 %v187
    %820 = vmatpush.msra.mxu0 %v183
    %821 = vmatpush.msra.mxu0 %v179
    %822 = vmatpush.msra.mxu0 %v175
    %823 = vmatpush.msra.mxu0 %v171
    %824 = vmatpush.msra.mxu0 %v167
    %825 = vmatpush.msra.mxu0 %v163
    %826 = vmatpush.msra.mxu0 %v159
    %827 = vmatpush.msra.mxu0 %v155
    %828 = vmatpush.msra.mxu0 %v151
    %829 = vmatpush.msra.mxu0 %v147
    %830 = vmatmul.f32.gmra.mxu0 %v753
    %v831 = vpop.f32.mrf.mxu0
    %v832 = vadd.f32 0.0, %v831
    %833 = vdwg.mxu0
    %v834 = vadd.f32 %v311, %v772
    %v835 = vadd.f32 %v352, %v792
    %v836 = vadd.f32 %v393, %v812
    %v837 = vadd.f32 %v434, %v832
    %v838 = vmul.f32 %v834, 0.5
    %v839 = vtanh.pop %v838
    %v840 = vadd.f32 %v839, 1.0
    %v841 = vmul.f32 %v840, 0.5
    %v842 = vmul.f32 %v835, 0.5
    %v843 = vtanh.pop %v842
    %v844 = vadd.f32 %v843, 1.0
    %v845 = vmul.f32 %v844, 0.5
    %v846 = vtanh.pop %v836
    %v847 = vmul.f32 %v837, 0.5
    %v848 = vtanh.pop %v847
    %v849 = vadd.f32 %v848, 1.0
    %v850 = vmul.f32 %v849, 0.5
    %v851 = vmul.f32 %v845, %v751
    %v852 = vmul.f32 %v841, %v846
    %v853 = vadd.f32 %v851, %v852
    %v854 = vtanh.pop %v853
    %v855 = vmul.f32 %v850, %v854
    %856 = vmatpush.msra.mxu0 %v204
    %857 = vmatpush.msra.mxu0 %v200
    %858 = vmatpush.msra.mxu0 %v196
    %859 = vmatpush.msra.mxu0 %v192
    %860 = vmatpush.msra.mxu0 %v188
    %861 = vmatpush.msra.mxu0 %v184
    %862 = vmatpush.msra.mxu0 %v180
    %863 = vmatpush.msra.mxu0 %v176
    %864 = vmatpush.msra.mxu0 %v172
    %865 = vmatpush.msra.mxu0 %v168
    %866 = vmatpush.msra.mxu0 %v164
    %867 = vmatpush.msra.mxu0 %v160
    %868 = vmatpush.msra.mxu0 %v156
    %869 = vmatpush.msra.mxu0 %v152
    %870 = vmatpush.msra.mxu0 %v148
    %871 = vmatpush.msra.mxu0 %v144
    %872 = vmatmul.f32.gmra.mxu0 %v855
    %v873 = vpop.f32.mrf.mxu0
    %v874 = vadd.f32 0.0, %v873
    %875 = vdwg.mxu0
    %876 = vmatpush.msra.mxu0 %v205
    %877 = vmatpush.msra.mxu0 %v201
    %878 = vmatpush.msra.mxu0 %v197
    %879 = vmatpush.msra.mxu0 %v193
    %880 = vmatpush.msra.mxu0 %v189
    %881 = vmatpush.msra.mxu0 %v185
    %882 = vmatpush.msra.mxu0 %v181
    %883 = vmatpush.msra.mxu0 %v177
    %884 = vmatpush.msra.mxu0 %v173
    %885 = vmatpush.msra.mxu0 %v169
    %886 = vmatpush.msra.mxu0 %v165
    %887 = vmatpush.msra.mxu0 %v161
    %888 = vmatpush.msra.mxu0 %v157
    %889 = vmatpush.msra.mxu0 %v153
    %890 = vmatpush.msra.mxu0 %v149
    %891 = vmatpush.msra.mxu0 %v145
    %892 = vmatmul.f32.gmra.mxu0 %v855
    %v893 = vpop.f32.mrf.mxu0
    %v894 = vadd.f32 0.0, %v893
    %895 = vdwg.mxu0
    %896 = vmatpush.msra.mxu0 %v206
    %897 = vmatpush.msra.mxu0 %v202
    %898 = vmatpush.msra.mxu0 %v198
    %899 = vmatpush.msra.mxu0 %v194
    %900 = vmatpush.msra.mxu0 %v190
    %901 = vmatpush.msra.mxu0 %v186
    %902 = vmatpush.msra.mxu0 %v182
    %903 = vmatpush.msra.mxu0 %v178
    %904 = vmatpush.msra.mxu0 %v174
    %905 = vmatpush.msra.mxu0 %v170
    %906 = vmatpush.msra.mxu0 %v166
    %907 = vmatpush.msra.mxu0 %v162
    %908 = vmatpush.msra.mxu0 %v158
    %909 = vmatpush.msra.mxu0 %v154
    %910 = vmatpush.msra.mxu0 %v150
    %911 = vmatpush.msra.mxu0 %v146
    %912 = vmatmul.f32.gmra.mxu0 %v855
    %v913 = vpop.f32.mrf.mxu0
    %v914 = vadd.f32 0.0, %v913
    %915 = vdwg.mxu0
    %916 = vmatpush.msra.mxu0 %v207
    %917 = vmatpush.msra.mxu0 %v203
    %918 = vmatpush.msra.mxu0 %v199
    %919 = vmatpush.msra.mxu0 %v195
    %920 = vmatpush.msra.mxu0 %v191
    %921 = vmatpush.msra.mxu0 %v187
    %922 = vmatpush.msra.mxu0 %v183
    %923 = vmatpush.msra.mxu0 %v179
    %924 = vmatpush.msra.mxu0 %v175
    %925 = vmatpush.msra.mxu0 %v171
    %926 = vmatpush.msra.mxu0 %v167
    %927 = vmatpush.msra.mxu0 %v163
    %928 = vmatpush.msra.mxu0 %v159
    %929 = vmatpush.msra.mxu0 %v155
    %930 = vmatpush.msra.mxu0 %v151
    %931 = vmatpush.msra.mxu0 %v147
    %932 = vmatmul.f32.gmra.mxu0 %v855
    %v933 = vpop.f32.mrf.mxu0
    %v934 = vadd.f32 0.0, %v933
    %935 = vdwg.mxu0
    %v936 = vadd.f32 %v314, %v874
    %v937 = vadd.f32 %v355, %v894
    %v938 = vadd.f32 %v396, %v914
    %v939 = vadd.f32 %v437, %v934
    %v940 = vmul.f32 %v936, 0.5
    %v941 = vtanh.pop %v940
    %v942 = vadd.f32 %v941, 1.0
    %v943 = vmul.f32 %v942, 0.5
    %v944 = vmul.f32 %v937, 0.5
    %v945 = vtanh.pop %v944
    %v946 = vadd.f32 %v945, 1.0
    %v947 = vmul.f32 %v946, 0.5
    %v948 = vtanh.pop %v938
    %v949 = vmul.f32 %v939, 0.5
    %v950 = vtanh.pop %v949
    %v951 = vadd.f32 %v950, 1.0
    %v952 = vmul.f32 %v951, 0.5
    %v953 = vmul.f32 %v947, %v853
    %v954 = vmul.f32 %v943, %v948
    %v955 = vadd.f32 %v953, %v954
    %v956 = vtanh.pop %v955
    %v957 = vmul.f32 %v952, %v956
    %958 = vmatpush.msra.mxu0 %v204
    %959 = vmatpush.msra.mxu0 %v200
    %960 = vmatpush.msra.mxu0 %v196
    %961 = vmatpush.msra.mxu0 %v192
    %962 = vmatpush.msra.mxu0 %v188
    %963 = vmatpush.msra.mxu0 %v184
    %964 = vmatpush.msra.mxu0 %v180
    %965 = vmatpush.msra.mxu0 %v176
    %966 = vmatpush.msra.mxu0 %v172
    %967 = vmatpush.msra.mxu0 %v168
    %968 = vmatpush.msra.mxu0 %v164
    %969 = vmatpush.msra.mxu0 %v160
    %970 = vmatpush.msra.mxu0 %v156
    %971 = vmatpush.msra.mxu0 %v152
    %972 = vmatpush.msra.mxu0 %v148
    %973 = vmatpush.msra.mxu0 %v144
    %974 = vmatmul.f32.gmra.mxu0 %v957
    %v975 = vpop.f32.mrf.mxu0
    %v976 = vadd.f32 0.0, %v975
    %977 = vdwg.mxu0
    %978 = vmatpush.msra.mxu0 %v205
    %979 = vmatpush.msra.mxu0 %v201
    %980 = vmatpush.msra.mxu0 %v197
    %981 = vmatpush.msra.mxu0 %v193
    %982 = vmatpush.msra.mxu0 %v189
    %983 = vmatpush.msra.mxu0 %v185
    %984 = vmatpush.msra.mxu0 %v181
    %985 = vmatpush.msra.mxu0 %v177
    %986 = vmatpush.msra.mxu0 %v173
    %987 = vmatpush.msra.mxu0 %v169
    %988 = vmatpush.msra.mxu0 %v165
    %989 = vmatpush.msra.mxu0 %v161
    %990 = vmatpush.msra.mxu0 %v157
    %991 = vmatpush.msra.mxu0 %v153
    %992 = vmatpush.msra.mxu0 %v149
    %993 = vmatpush.msra.mxu0 %v145
    %994 = vmatmul.f32.gmra.mxu0 %v957
    %v995 = vpop.f32.mrf.mxu0
    %v996 = vadd.f32 0.0, %v995
    %997 = vdwg.mxu0
    %998 = vmatpush.msra.mxu0 %v206
    %999 = vmatpush.msra.mxu0 %v202
    %1000 = vmatpush.msra.mxu0 %v198
    %1001 = vmatpush.msra.mxu0 %v194
    %1002 = vmatpush.msra.mxu0 %v190
    %1003 = vmatpush.msra.mxu0 %v186
    %1004 = vmatpush.msra.mxu0 %v182
    %1005 = vmatpush.msra.mxu0 %v178
    %1006 = vmatpush.msra.mxu0 %v174
    %1007 = vmatpush.msra.mxu0 %v170
    %1008 = vmatpush.msra.mxu0 %v166
    %1009 = vmatpush.msra.mxu0 %v162
    %1010 = vmatpush.msra.mxu0 %v158
    %1011 = vmatpush.msra.mxu0 %v154
    %1012 = vmatpush.msra.mxu0 %v150
    %1013 = vmatpush.msra.mxu0 %v146
    %1014 = vmatmul.f32.gmra.mxu0 %v957
    %v1015 = vpop.f32.mrf.mxu0
    %v1016 = vadd.f32 0.0, %v1015
    %1017 = vdwg.mxu0
    %1018 = vmatpush.msra.mxu0 %v207
    %1019 = vmatpush.msra.mxu0 %v203
    %1020 = vmatpush.msra.mxu0 %v199
    %1021 = vmatpush.msra.mxu0 %v195
    %1022 = vmatpush.msra.mxu0 %v191
    %1023 = vmatpush.msra.mxu0 %v187
    %1024 = vmatpush.msra.mxu0 %v183
    %1025 = vmatpush.msra.mxu0 %v179
    %1026 = vmatpush.msra.mxu0 %v175
    %1027 = vmatpush.msra.mxu0 %v171
    %1028 = vmatpush.msra.mxu0 %v167
    %1029 = vmatpush.msra.mxu0 %v163
    %1030 = vmatpush.msra.mxu0 %v159
    %1031 = vmatpush.msra.mxu0 %v155
    %1032 = vmatpush.msra.mxu0 %v151
    %1033 = vmatpush.msra.mxu0 %v147
    %1034 = vmatmul.f32.gmra.mxu0 %v957
    %v1035 = vpop.f32.mrf.mxu0
    %v1036 = vadd.f32 0.0, %v1035
    %1037 = vdwg.mxu0
    %v1038 = vadd.f32 %v317, %v976
    %v1039 = vadd.f32 %v358, %v996
    %v1040 = vadd.f32 %v399, %v1016
    %v1041 = vadd.f32 %v440, %v1036
    %v1042 = vmul.f32 %v1038, 0.5
    %v1043 = vtanh.pop %v1042
    %v1044 = vadd.f32 %v1043, 1.0
    %v1045 = vmul.f32 %v1044, 0.5
    %v1046 = vmul.f32 %v1039, 0.5
    %v1047 = vtanh.pop %v1046
    %v1048 = vadd.f32 %v1047, 1.0
    %v1049 = vmul.f32 %v1048, 0.5
    %v1050 = vtanh.pop %v1040
    %v1051 = vmul.f32 %v1041, 0.5
    %v1052 = vtanh.pop %v1051
    %v1053 = vadd.f32 %v1052, 1.0
    %v1054 = vmul.f32 %v1053, 0.5
    %v1055 = vmul.f32 %v1049, %v955
    %v1056 = vmul.f32 %v1045, %v1050
    %v1057 = vadd.f32 %v1055, %v1056
    %v1058 = vtanh.pop %v1057
    %v1059 = vmul.f32 %v1054, %v1058
    %1060 = vmatpush.msra.mxu0 %v204
    %1061 = vmatpush.msra.mxu0 %v200
    %1062 = vmatpush.msra.mxu0 %v196
    %1063 = vmatpush.msra.mxu0 %v192
    %1064 = vmatpush.msra.mxu0 %v188
    %1065 = vmatpush.msra.mxu0 %v184
    %1066 = vmatpush.msra.mxu0 %v180
    %1067 = vmatpush.msra.mxu0 %v176
    %1068 = vmatpush.msra.mxu0 %v172
    %1069 = vmatpush.msra.mxu0 %v168
    %1070 = vmatpush.msra.mxu0 %v164
    %1071 = vmatpush.msra.mxu0 %v160
    %1072 = vmatpush.msra.mxu0 %v156
    %1073 = vmatpush.msra.mxu0 %v152
    %1074 = vmatpush.msra.mxu0 %v148
    %1075 = vmatpush.msra.mxu0 %v144
    %1076 = vmatmul.f32.gmra.mxu0 %v1059
    %v1077 = vpop.f32.mrf.mxu0
    %v1078 = vadd.f32 0.0, %v1077
    %1079 = vdwg.mxu0
    %1080 = vmatpush.msra.mxu0 %v205
    %1081 = vmatpush.msra.mxu0 %v201
    %1082 = vmatpush.msra.mxu0 %v197
    %1083 = vmatpush.msra.mxu0 %v193
    %1084 = vmatpush.msra.mxu0 %v189
    %1085 = vmatpush.msra.mxu0 %v185
    %1086 = vmatpush.msra.mxu0 %v181
    %1087 = vmatpush.msra.mxu0 %v177
    %1088 = vmatpush.msra.mxu0 %v173
    %1089 = vmatpush.msra.mxu0 %v169
    %1090 = vmatpush.msra.mxu0 %v165
    %1091 = vmatpush.msra.mxu0 %v161
    %1092 = vmatpush.msra.mxu0 %v157
    %1093 = vmatpush.msra.mxu0 %v153
    %1094 = vmatpush.msra.mxu0 %v149
    %1095 = vmatpush.msra.mxu0 %v145
    %1096 = vmatmul.f32.gmra.mxu0 %v1059
    %v1097 = vpop.f32.mrf.mxu0
    %v1098 = vadd.f32 0.0, %v1097
    %1099 = vdwg.mxu0
    %1100 = vmatpush.msra.mxu0 %v206
    %1101 = vmatpush.msra.mxu0 %v202
    %1102 = vmatpush.msra.mxu0 %v198
    %1103 = vmatpush.msra.mxu0 %v194
    %1104 = vmatpush.msra.mxu0 %v190
    %1105 = vmatpush.msra.mxu0 %v186
    %1106 = vmatpush.msra.mxu0 %v182
    %1107 = vmatpush.msra.mxu0 %v178
    %1108 = vmatpush.msra.mxu0 %v174
    %1109 = vmatpush.msra.mxu0 %v170
    %1110 = vmatpush.msra.mxu0 %v166
    %1111 = vmatpush.msra.mxu0 %v162
    %1112 = vmatpush.msra.mxu0 %v158
    %1113 = vmatpush.msra.mxu0 %v154
    %1114 = vmatpush.msra.mxu0 %v150
    %1115 = vmatpush.msra.mxu0 %v146
    %1116 = vmatmul.f32.gmra.mxu0 %v1059
    %v1117 = vpop.f32.mrf.mxu0
    %v1118 = vadd.f32 0.0, %v1117
    %1119 = vdwg.mxu0
    %1120 = vmatpush.msra.mxu0 %v207
    %1121 = vmatpush.msra.mxu0 %v203
    %1122 = vmatpush.msra.mxu0 %v199
    %1123 = vmatpush.msra.mxu0 %v195
    %1124 = vmatpush.msra.mxu0 %v191
    %1125 = vmatpush.msra.mxu0 %v187
    %1126 = vmatpush.msra.mxu0 %v183
    %1127 = vmatpush.msra.mxu0 %v179
    %1128 = vmatpush.msra.mxu0 %v175
    %1129 = vmatpush.msra.mxu0 %v171
    %1130 = vmatpush.msra.mxu0 %v167
    %1131 = vmatpush.msra.mxu0 %v163
    %1132 = vmatpush.msra.mxu0 %v159
    %1133 = vmatpush.msra.mxu0 %v155
    %1134 = vmatpush.msra.mxu0 %v151
    %1135 = vmatpush.msra.mxu0 %v147
    %1136 = vmatmul.f32.gmra.mxu0 %v1059
    %v1137 = vpop.f32.mrf.mxu0
    %v1138 = vadd.f32 0.0, %v1137
    %1139 = vdwg.mxu0
    %v1140 = vadd.f32 %v320, %v1078
    %v1141 = vadd.f32 %v361, %v1098
    %v1142 = vadd.f32 %v402, %v1118
    %v1143 = vadd.f32 %v443, %v1138
    %v1144 = vmul.f32 %v1140, 0.5
    %v1145 = vtanh.pop %v1144
    %v1146 = vadd.f32 %v1145, 1.0
    %v1147 = vmul.f32 %v1146, 0.5
    %v1148 = vmul.f32 %v1141, 0.5
    %v1149 = vtanh.pop %v1148
    %v1150 = vadd.f32 %v1149, 1.0
    %v1151 = vmul.f32 %v1150, 0.5
    %v1152 = vtanh.pop %v1142
    %v1153 = vmul.f32 %v1143, 0.5
    %v1154 = vtanh.pop %v1153
    %v1155 = vadd.f32 %v1154, 1.0
    %v1156 = vmul.f32 %v1155, 0.5
    %v1157 = vmul.f32 %v1151, %v1057
    %v1158 = vmul.f32 %v1147, %v1152
    %v1159 = vadd.f32 %v1157, %v1158
    %v1160 = vtanh.pop %v1159
    %v1161 = vmul.f32 %v1156, %v1160
    %1162 = vmatpush.msra.mxu0 %v204
    %1163 = vmatpush.msra.mxu0 %v200
    %1164 = vmatpush.msra.mxu0 %v196
    %1165 = vmatpush.msra.mxu0 %v192
    %1166 = vmatpush.msra.mxu0 %v188
    %1167 = vmatpush.msra.mxu0 %v184
    %1168 = vmatpush.msra.mxu0 %v180
    %1169 = vmatpush.msra.mxu0 %v176
    %1170 = vmatpush.msra.mxu0 %v172
    %1171 = vmatpush.msra.mxu0 %v168
    %1172 = vmatpush.msra.mxu0 %v164
    %1173 = vmatpush.msra.mxu0 %v160
    %1174 = vmatpush.msra.mxu0 %v156
    %1175 = vmatpush.msra.mxu0 %v152
    %1176 = vmatpush.msra.mxu0 %v148
    %1177 = vmatpush.msra.mxu0 %v144
    %1178 = vmatmul.f32.gmra.mxu0 %v1161
    %v1179 = vpop.f32.mrf.mxu0
    %v1180 = vadd.f32 0.0, %v1179
    %1181 = vdwg.mxu0
    %1182 = vmatpush.msra.mxu0 %v205
    %1183 = vmatpush.msra.mxu0 %v201
    %1184 = vmatpush.msra.mxu0 %v197
    %1185 = vmatpush.msra.mxu0 %v193
    %1186 = vmatpush.msra.mxu0 %v189
    %1187 = vmatpush.msra.mxu0 %v185
    %1188 = vmatpush.msra.mxu0 %v181
    %1189 = vmatpush.msra.mxu0 %v177
    %1190 = vmatpush.msra.mxu0 %v173
    %1191 = vmatpush.msra.mxu0 %v169
    %1192 = vmatpush.msra.mxu0 %v165
    %1193 = vmatpush.msra.mxu0 %v161
    %1194 = vmatpush.msra.mxu0 %v157
    %1195 = vmatpush.msra.mxu0 %v153
    %1196 = vmatpush.msra.mxu0 %v149
    %1197 = vmatpush.msra.mxu0 %v145
    %1198 = vmatmul.f32.gmra.mxu0 %v1161
    %v1199 = vpop.f32.mrf.mxu0
    %v1200 = vadd.f32 0.0, %v1199
    %1201 = vdwg.mxu0
    %1202 = vmatpush.msra.mxu0 %v206
    %1203 = vmatpush.msra.mxu0 %v202
    %1204 = vmatpush.msra.mxu0 %v198
    %1205 = vmatpush.msra.mxu0 %v194
    %1206 = vmatpush.msra.mxu0 %v190
    %1207 = vmatpush.msra.mxu0 %v186
    %1208 = vmatpush.msra.mxu0 %v182
    %1209 = vmatpush.msra.mxu0 %v178
    %1210 = vmatpush.msra.mxu0 %v174
    %1211 = vmatpush.msra.mxu0 %v170
    %1212 = vmatpush.msra.mxu0 %v166
    %1213 = vmatpush.msra.mxu0 %v162
    %1214 = vmatpush.msra.mxu0 %v158
    %1215 = vmatpush.msra.mxu0 %v154
    %1216 = vmatpush.msra.mxu0 %v150
    %1217 = vmatpush.msra.mxu0 %v146
    %1218 = vmatmul.f32.gmra.mxu0 %v1161
    %v1219 = vpop.f32.mrf.mxu0
    %v1220 = vadd.f32 0.0, %v1219
    %1221 = vdwg.mxu0
    %1222 = vmatpush.msra.mxu0 %v207
    %1223 = vmatpush.msra.mxu0 %v203
    %1224 = vmatpush.msra.mxu0 %v199
    %1225 = vmatpush.msra.mxu0 %v195
    %1226 = vmatpush.msra.mxu0 %v191
    %1227 = vmatpush.msra.mxu0 %v187
    %1228 = vmatpush.msra.mxu0 %v183
    %1229 = vmatpush.msra.mxu0 %v179
    %1230 = vmatpush.msra.mxu0 %v175
    %1231 = vmatpush.msra.mxu0 %v171
    %1232 = vmatpush.msra.mxu0 %v167
    %1233 = vmatpush.msra.mxu0 %v163
    %1234 = vmatpush.msra.mxu0 %v159
    %1235 = vmatpush.msra.mxu0 %v155
    %1236 = vmatpush.msra.mxu0 %v151
    %1237 = vmatpush.msra.mxu0 %v147
    %1238 = vmatmul.f32.gmra.mxu0 %v1161
    %v1239 = vpop.f32.mrf.mxu0
    %v1240 = vadd.f32 0.0, %v1239
    %1241 = vdwg.mxu0
    %v1242 = vadd.f32 %v323, %v1180
    %v1243 = vadd.f32 %v364, %v1200
    %v1244 = vadd.f32 %v405, %v1220
    %v1245 = vadd.f32 %v446, %v1240
    %v1246 = vmul.f32 %v1242, 0.5
    %v1247 = vtanh.pop %v1246
    %v1248 = vadd.f32 %v1247, 1.0
    %v1249 = vmul.f32 %v1248, 0.5
    %v1250 = vmul.f32 %v1243, 0.5
    %v1251 = vtanh.pop %v1250
    %v1252 = vadd.f32 %v1251, 1.0
    %v1253 = vmul.f32 %v1252, 0.5
    %v1254 = vtanh.pop %v1244
    %v1255 = vmul.f32 %v1245, 0.5
    %v1256 = vtanh.pop %v1255
    %v1257 = vadd.f32 %v1256, 1.0
    %v1258 = vmul.f32 %v1257, 0.5
    %v1259 = vmul.f32 %v1253, %v1159
    %v1260 = vmul.f32 %v1249, %v1254
    %v1261 = vadd.f32 %v1259, %v1260
    %v1262 = vtanh.pop %v1261
    %v1263 = vmul.f32 %v1258, %v1262
    %v1265 = vperm.slane %v224, 0
    %1267 = vmatpush.msra.mxu0 %v223
    %1268 = vmatpush.msra.mxu0 %v222
    %1269 = vmatpush.msra.mxu0 %v221
    %1270 = vmatpush.msra.mxu0 %v220
    %1271 = vmatpush.msra.mxu0 %v219
    %1272 = vmatpush.msra.mxu0 %v218
    %1273 = vmatpush.msra.mxu0 %v217
    %1274 = vmatpush.msra.mxu0 %v216
    %1275 = vmatpush.msra.mxu0 %v215
    %1276 = vmatpush.msra.mxu0 %v214
    %1277 = vmatpush.msra.mxu0 %v213
    %1278 = vmatpush.msra.mxu0 %v212
    %1279 = vmatpush.msra.mxu0 %v211
    %1280 = vmatpush.msra.mxu0 %v210
    %1281 = vmatpush.msra.mxu0 %v209
    %1282 = vmatpush.msra.mxu0 %v208
    %1283 = vmatmul.f32.gmra.mxu0 %v1263
    %v1284 = vpop.f32.mrf.mxu0
    %v1285 = vadd.f32 %v1265, %v1284
    %1286 = vdwg.mxu0
    %v1287 = vmul.f32 %v1285, 0.5
    %v1288 = vtanh.pop %v1287
    %v1289 = vadd.f32 %v1288, 1.0
    %v1290 = vmul.f32 %v1289, 0.5
    %1291 = vst [vmem:[#allocation8] sm:$0xff] %v1290
    // Predicated region
    $region38: #{tpu_custom_call.1} parent=1 // pred_check
      _
    $region39: #{tpu_custom_call.1} parent=1 // pred_check_branch
      %1293 = sbr.rel (0) target = $region41
    $region40: #{tpu_custom_call.1} parent=1 // pred_region
      %1295 = vsyncadd [#allocation4], 0
      %s1297 = sshll.u32 [#allocation8], 4
      %s1298 = int_to_ptr.vmem [resolvable:$true] %s1297
      %s1299 = sshll.u32 %s6, 4
      %s1300 = int_to_ptr.hbm [resolvable:$true] %s1299
      %1302 = dma.vmem_to_hbm [thread:$0]  %s1298, 128, %s1300, [#allocation4]
    $region41: #{tpu_custom_call.1} parent=1 // pred_fallthru
      _
    // Predicated region
    $region42: #{tpu_custom_call.1} parent=1 // pred_check
      _
    $region43: #{tpu_custom_call.1} parent=1 // pred_check_branch
      %1304 = sbr.rel (0) target = $region45
    $region44: #{tpu_custom_call.1} parent=1 // pred_region
      %1306 = dma.done [#allocation4], 128
    $region45: #{tpu_custom_call.1} parent=1 // pred_fallthru
      _
    %1307 = vsyncpa [#allocation3], 1
    %1308 = vsyncpa [#allocation6], 1
    %1309 = vsyncpa [#allocation4], 1

</llo_original>
